<compile_context>
chip_gen: v6e
topology: v6e:2x2x1
jax: 0.10.0
libtpu: 0.0.40
codegen_flags: <defaults>
</compile_context>

<pallas_src>
import functools
import math

import jax
import jax.numpy as jnp
from jax import lax
from jax.experimental import pallas as pl
from jax.experimental.pallas import tpu as pltpu

NEG_INF = -100000000.0  # matches torch masked_fill(-1e8)


# ----------------------------- kernel bodies -----------------------------

def _attend(q_sc, kv_sc, heads_sc, am_ref, kp_ref, wo_ref, out_ref, attn_ref, n_heads, norm):
    """q_sc:(tq,H*D) kv_sc:(Nk,2*H*D) bf16 scratch.  Writes out (1,tq,E), attn (H,1,tq,Nk)."""
    tq, hd = q_sc.shape
    nk = kv_sc.shape[0]
    d = hd // n_heads

    # Combine masks once on the VPU (torch: masked where attn_mask + key_padding_mask > 0).
    masked = None
    if am_ref is not None and kp_ref is not None:
        masked = (am_ref[0] + kp_ref[0]) > 0.0                       # (tq, Nk)
    elif am_ref is not None:
        masked = am_ref[0] > 0.0                                     # (tq, Nk)
    elif kp_ref is not None:
        masked = jnp.broadcast_to(kp_ref[0], (tq, nk)) > 0.0         # (tq, Nk)

    for h in range(n_heads):                                         # static unroll; H is small
        lo, hi = h * d, (h + 1) * d
        qh = q_sc[:, lo:hi]                                          # (tq, D) bf16 Ref slice
        kh = kv_sc[:, lo:hi]                                         # (Nk, D)
        vh = kv_sc[:, hd + lo:hd + hi]                               # (Nk, D)
        s = norm * lax.dot_general(qh, kh, (((1,), (1,)), ((), ())),
                                   preferred_element_type=jnp.float32)   # (tq, Nk) f32
        if masked is not None:
            s = jnp.where(masked, NEG_INF, s)
        smax = jnp.max(s, axis=-1, keepdims=True)
        e = jnp.exp(s - smax)
        p = e * (1.0 / jnp.sum(e, axis=-1, keepdims=True))           # exact: rows sum to 1
        attn_ref[h, 0] = p                                           # direct store, no stack
        heads_sc[:, lo:hi] = jnp.dot(p.astype(jnp.bfloat16), vh,
                                     preferred_element_type=jnp.float32
                                     ).astype(heads_sc.dtype)
    out_ref[0] = jnp.dot(heads_sc[...], wo_ref[...],
                         preferred_element_type=jnp.float32).astype(out_ref.dtype)


def _mha_shared_kv_kernel(*refs, n_heads, norm, has_attn_mask, has_kp_mask):
    """Self-attention / k-is-v cross-attention: fused (E, 2*H*D) K|V projection."""
    it = iter(refs)
    q_ref, kv_ref = next(it), next(it)
    am_ref = next(it) if has_attn_mask else None
    kp_ref = next(it) if has_kp_mask else None
    wq_ref, wkv_ref, wo_ref = next(it), next(it), next(it)
    out_ref, attn_ref = next(it), next(it)
    q_sc, kv_sc, heads_sc = next(it), next(it), next(it)

    # Stage bf16 projections in VMEM scratch; per-head slices below are cheap Ref views.
    q_sc[...] = jnp.dot(q_ref[0], wq_ref[...],
                        preferred_element_type=jnp.float32).astype(q_sc.dtype)
    kv_sc[...] = jnp.dot(kv_ref[0], wkv_ref[...],
                         preferred_element_type=jnp.float32).astype(kv_sc.dtype)
    _attend(q_sc, kv_sc, heads_sc, am_ref, kp_ref, wo_ref, out_ref, attn_ref, n_heads, norm)


def _mha_general_kernel(*refs, n_heads, norm, has_attn_mask, has_kp_mask):
    """General q/k/v attention (k and v are different arrays)."""
    it = iter(refs)
    q_ref, k_ref, v_ref = next(it), next(it), next(it)
    am_ref = next(it) if has_attn_mask else None
    kp_ref = next(it) if has_kp_mask else None
    wq_ref, wk_ref, wv_ref, wo_ref = next(it), next(it), next(it), next(it)
    out_ref, attn_ref = next(it), next(it)
    q_sc, kv_sc, heads_sc = next(it), next(it), next(it)

    hd = wo_ref.shape[0]
    q_sc[...] = jnp.dot(q_ref[0], wq_ref[...],
                        preferred_element_type=jnp.float32).astype(q_sc.dtype)
    kv_sc[:, :hd] = jnp.dot(k_ref[0], wk_ref[...],
                            preferred_element_type=jnp.float32).astype(kv_sc.dtype)
    kv_sc[:, hd:] = jnp.dot(v_ref[0], wv_ref[...],
                            preferred_element_type=jnp.float32).astype(kv_sc.dtype)
    _attend(q_sc, kv_sc, heads_sc, am_ref, kp_ref, wo_ref, out_ref, attn_ref, n_heads, norm)


# ----------------------------- wrapper -----------------------------

def _fused_head_weight(w):
    """(H, E, D) -> (E, H*D); column h*D+d == w[h, :, d], so head h lives in lanes [h*D,(h+1)*D)."""
    H, E, D = w.shape
    return jnp.transpose(w, (1, 0, 2)).reshape(E, H * D)


def _choose_q_tile(nq, target):
    """Largest multiple-of-8 divisor of nq that is <= target (or nq itself if small/ragged)."""
    if nq <= target:
        return nq
    t = (min(target, nq) // 8) * 8
    while t >= 8:
        if nq % t == 0:
            return t
        t -= 8
    return nq


def multi_head_attention(params, q, k=None, v=None, key_padding_mask=None, attn_mask=None,
                         q_tile_target=256):
    """Pallas MHA matching the torch module.

    q:(B,Nq,E), k/v:(B,Nk,E) (default to q), key_padding_mask:(B,1,Nk), attn_mask:(B,Nq,Nk).
    Returns (out (B,Nq,E) f32, attention (H,B,Nq,Nk) f32).
    """
    if k is None:
        k = q
    if v is None:
        v = q                       # torch default: v falls back to q, not k
    shared_kv = k is v              # self-attention, or caller passed the same k/v array

    B, Nq, E = q.shape
    Nk = k.shape[1]
    H, _, D = params["w_query"].shape
    HD = H * D
    norm = 1.0 / math.sqrt(D)
    if not shared_kv:
        assert v.shape[1] == Nk, "attention @ V requires len(k) == len(v)"

    # TODO(synk): on v7x (64 MiB physical VMEM) use roughly half this q-tile target.
    tq = _choose_q_tile(Nq, q_tile_target)
    n_qt = Nq // tq

    has_am = attn_mask is not None
    has_kp = key_padding_mask is not None

    # bf16 MXU operands (f32 accumulation inside the kernel); weights packed head-major.
    q_bf = q.astype(jnp.bfloat16)
    wq = _fused_head_weight(params["w_query"]).astype(jnp.bfloat16)     # (E, H*D)
    wo = params["w_out"].reshape(HD, E).astype(jnp.bfloat16)            # == torch w_out.view(-1,E)

    inputs = [q_bf]
    in_specs = [pl.BlockSpec((1, tq, E), lambda b, qi: (b, qi, 0))]
    if shared_kv:
        kv_bf = q_bf if k is q else k.astype(jnp.bfloat16)
        inputs.append(kv_bf)
        in_specs.append(pl.BlockSpec((1, Nk, E), lambda b, qi: (b, 0, 0)))
    else:
        inputs += [k.astype(jnp.bfloat16), v.astype(jnp.bfloat16)]
        in_specs += [pl.BlockSpec((1, Nk, E), lambda b, qi: (b, 0, 0)),
                     pl.BlockSpec((1, Nk, E), lambda b, qi: (b, 0, 0))]
    # Masks stay un-broadcast (and are skipped entirely when None); combine happens in-kernel.
    if has_am:
        inputs.append(attn_mask.astype(jnp.float32))
        in_specs.append(pl.BlockSpec((1, tq, Nk), lambda b, qi: (b, qi, 0)))
    if has_kp:
        inputs.append(key_padding_mask.astype(jnp.float32))
        in_specs.append(pl.BlockSpec((1, 1, Nk), lambda b, qi: (b, 0, 0)))

    if shared_kv:
        wkv = jnp.concatenate([_fused_head_weight(params["w_key"]),
                               _fused_head_weight(params["w_value"])],
                              axis=1).astype(jnp.bfloat16)               # (E, 2*H*D)
        inputs += [wq, wkv, wo]
        in_specs += [pl.BlockSpec((E, HD), lambda b, qi: (0, 0)),
                     pl.BlockSpec((E, 2 * HD), lambda b, qi: (0, 0)),
                     pl.BlockSpec((HD, E), lambda b, qi: (0, 0))]
        kernel = functools.partial(_mha_shared_kv_kernel, n_heads=H, norm=norm,
                                   has_attn_mask=has_am, has_kp_mask=has_kp)
    else:
        wk = _fused_head_weight(params["w_key"]).astype(jnp.bfloat16)
        wv = _fused_head_weight(params["w_value"]).astype(jnp.bfloat16)
        inputs += [wq, wk, wv, wo]
        in_specs += [pl.BlockSpec((E, HD), lambda b, qi: (0, 0)),
                     pl.BlockSpec((E, HD), lambda b, qi: (0, 0)),
                     pl.BlockSpec((E, HD), lambda b, qi: (0, 0)),
                     pl.BlockSpec((HD, E), lambda b, qi: (0, 0))]
        kernel = functools.partial(_mha_general_kernel, n_heads=H, norm=norm,
                                   has_attn_mask=has_am, has_kp_mask=has_kp)

    out_shape = (jax.ShapeDtypeStruct((B, Nq, E), jnp.float32),
                 jax.ShapeDtypeStruct((H, B, Nq, Nk), jnp.float32))
    out_specs = (pl.BlockSpec((1, tq, E), lambda b, qi: (b, qi, 0)),
                 pl.BlockSpec((H, 1, tq, Nk), lambda b, qi: (0, b, qi, 0)))
    scratch_shapes = [pltpu.VMEM((tq, HD), jnp.bfloat16),       # Q projection
                      pltpu.VMEM((Nk, 2 * HD), jnp.bfloat16),   # K | V projections
                      pltpu.VMEM((tq, HD), jnp.bfloat16)]       # per-head P@V slab

    return pl.pallas_call(
        kernel,
        out_shape=out_shape,
        grid=(B, n_qt),
        in_specs=in_specs,
        out_specs=out_specs,
        scratch_shapes=scratch_shapes,
        compiler_params=pltpu.CompilerParams(
            dimension_semantics=("parallel", "parallel"),
            vmem_limit_bytes=64 * 1024 * 1024),
    )(*inputs)


# ------------------- pure-JAX reference (torch semantics) -------------------

def mha_reference(params, q, k=None, v=None, key_padding_mask=None, attn_mask=None):
    if k is None:
        k = q
    if v is None:
        v = q
    H, E, D = params["w_query"].shape
    B, Nk, _ = k.shape
    Nq = q.shape[1]
    norm = 1.0 / math.sqrt(D)
    Q = jnp.einsum("me,hed->hmd", q.reshape(-1, E), params["w_query"]).reshape(H, B, Nq, D)
    K = jnp.einsum("me,hed->hmd", k.reshape(-1, E), params["w_key"]).reshape(H, B, Nk, D)
    V = jnp.einsum("me,hed->hmd", v.reshape(-1, E), params["w_value"]).reshape(H, B, Nk, D)
    U = norm * jnp.einsum("hbqd,hbkd->hbqk", Q, K)
    mask = None
    if attn_mask is not None:
        mask = attn_mask.reshape(1, B, Nq, Nk)
    if key_padding_mask is not None:
        kp = jnp.broadcast_to(key_padding_mask, (B, Nq, Nk)).reshape(1, B, Nq, Nk)
        mask = kp if mask is None else mask + kp
    if mask is not None:
        U = jnp.where(jnp.broadcast_to(mask, U.shape) > 0, NEG_INF, U)
    attention = jax.nn.softmax(U, axis=-1)
    heads = jnp.einsum("hbqk,hbkd->hbqd", attention, V)
    heads_perm = jnp.transpose(heads, (1, 2, 0, 3)).reshape(-1, H * D)
    out = (heads_perm @ params["w_out"].reshape(H * D, E)).reshape(B, Nq, E)
    return out, attention


# ----------------------------------- main -----------------------------------

if __name__ == "__main__":
    B, N, E, H = 2, 16, 32, 4
    D = E // H

    key = jax.random.PRNGKey(0)
    kq, kk, kv, ko, kx, km, kmem, kmem2 = jax.random.split(key, 8)

    def xavier(rk, shape, fan_in, fan_out):
        bound = math.sqrt(6.0 / (fan_in + fan_out))
        return jax.random.uniform(rk, shape, jnp.float32, -bound, bound)

    params = {
        "w_query": xavier(kq, (H, E, D), E, D),
        "w_key":   xavier(kk, (H, E, D), E, D),
        "w_value": xavier(kv, (H, E, D), E, D),
        "w_out":   xavier(ko, (H, D, E), D, E),
    }

    x = jax.random.normal(kx, (B, N, E), jnp.float32)
    # key padding mask: last 3 keys padded (1.0 == masked)
    key_padding_mask = jnp.zeros((B, 1, N), jnp.float32).at[:, :, N - 3:].set(1.0)
    # random attention mask (1.0 == masked), keep self-edges open
    attn_mask = (jax.random.uniform(km, (B, N, N)) > 0.7).astype(jnp.float32)
    attn_mask = attn_mask * (1.0 - jnp.eye(N, dtype=jnp.float32)[None])

    TOL = dict(rtol=3e-2, atol=3e-2)   # bf16 MXU operands (f32 accumulation / f32 softmax)

    # ---- self-attention (k = v = q), both masks: shared-kv kernel, fused K|V weights ----
    out, attn = multi_head_attention(params, x,
                                     key_padding_mask=key_padding_mask, attn_mask=attn_mask)
    out, attn = jax.block_until_ready((out, attn))
    ref_out, ref_attn = mha_reference(params, x,
                                      key_padding_mask=key_padding_mask, attn_mask=attn_mask)
    assert out.shape == (B, N, E), out.shape
    assert attn.shape == (H, B, N, N), attn.shape
    assert bool(jnp.all(jnp.isfinite(out))) and bool(jnp.all(jnp.isfinite(attn)))
    assert bool(jnp.allclose(out, ref_out, **TOL))
    assert bool(jnp.allclose(attn, ref_attn, rtol=2e-2, atol=2e-2))

    # ---- cross-attention (1 query vs memory, k is v), key-padding mask only ----
    q1 = x[:, :1, :]
    mem = jax.random.normal(kmem, (B, N, E), jnp.float32)
    out_c, attn_c = multi_head_attention(params, q1, mem, mem,
                                         key_padding_mask=key_padding_mask)
    out_c, attn_c = jax.block_until_ready((out_c, attn_c))
    ref_out_c, ref_attn_c = mha_reference(params, q1, mem, mem,
                                          key_padding_mask=key_padding_mask)
    assert out_c.shape == (B, 1, E), out_c.shape
    assert attn_c.shape == (H, B, 1, N), attn_c.shape
    assert bool(jnp.allclose(out_c, ref_out_c, **TOL))
    assert bool(jnp.allclose(attn_c, ref_attn_c, rtol=2e-2, atol=2e-2))

    # ---- general cross-attention (k != v), no masks: general kernel, no-mask variant ----
    mem2 = jax.random.normal(kmem2, (B, N, E), jnp.float32)
    out_g, attn_g = multi_head_attention(params, x, mem, mem2)
    out_g, attn_g = jax.block_until_ready((out_g, attn_g))
    ref_out_g, ref_attn_g = mha_reference(params, x, mem, mem2)
    assert out_g.shape == (B, N, E), out_g.shape
    assert attn_g.shape == (H, B, N, N), attn_g.shape
    assert bool(jnp.allclose(out_g, ref_out_g, **TOL))
    assert bool(jnp.allclose(attn_g, ref_attn_g, rtol=2e-2, atol=2e-2))

    print("KERNEL_OK")
</pallas_src>

<mosaic_0001>
module attributes {stable_mosaic.version = 11 : i64} {
  func.func @_mha_shared_kv_kernel(%arg0: i32, %arg1: i32, %arg2: memref<1x16x32xbf16, #tpu.memory_space<vmem>>, %arg3: memref<1x16x32xbf16, #tpu.memory_space<vmem>>, %arg4: memref<1x16x16xf32, #tpu.memory_space<vmem>>, %arg5: memref<1x1x16xf32, #tpu.memory_space<vmem>>, %arg6: memref<32x32xbf16, #tpu.memory_space<vmem>>, %arg7: memref<32x64xbf16, #tpu.memory_space<vmem>>, %arg8: memref<32x32xbf16, #tpu.memory_space<vmem>>, %arg9: memref<1x16x32xf32, #tpu.memory_space<vmem>>, %arg10: memref<4x1x16x16xf32, #tpu.memory_space<vmem>>, %arg11: memref<16x32xbf16, #tpu.memory_space<vmem>>, %arg12: memref<16x64xbf16, #tpu.memory_space<vmem>>, %arg13: memref<16x32xbf16, #tpu.memory_space<vmem>>) attributes {dimension_semantics = [#tpu.dimension_semantics<parallel>, #tpu.dimension_semantics<parallel>], iteration_bounds = array<i64: 2, 1>, scalar_prefetch = 0 : i64, scratch_operands = 3 : i64, tpu.core_type = #tpu.core_type<tc>, window_params = [{transform_indices = @transform_0, window_bounds = array<i64: 1, 16, 32>}, {transform_indices = @transform_1, window_bounds = array<i64: 1, 16, 32>}, {transform_indices = @transform_2, window_bounds = array<i64: 1, 16, 16>}, {transform_indices = @transform_3, window_bounds = array<i64: 1, 1, 16>}, {pipeline_mode = #tpu.pipeline_mode<synchronous>, transform_indices = @transform_4, window_bounds = array<i64: 32, 32>}, {pipeline_mode = #tpu.pipeline_mode<synchronous>, transform_indices = @transform_5, window_bounds = array<i64: 32, 64>}, {pipeline_mode = #tpu.pipeline_mode<synchronous>, transform_indices = @transform_6, window_bounds = array<i64: 32, 32>}, {transform_indices = @transform_7, window_bounds = array<i64: 1, 16, 32>}, {transform_indices = @transform_8, window_bounds = array<i64: 4, 1, 16, 16>}]} {
    %c0 = arith.constant 0 : index
    %c0_0 = arith.constant 0 : index
    %c0_1 = arith.constant 0 : index
    %0 = vector.load %arg2[%c0, %c0_0, %c0_1] : memref<1x16x32xbf16, #tpu.memory_space<vmem>>, vector<1x16x32xbf16>
    %1 = vector.shape_cast %0 : vector<1x16x32xbf16> to vector<16x32xbf16>
    %c0_2 = arith.constant 0 : index
    %c0_3 = arith.constant 0 : index
    %2 = vector.load %arg6[%c0_2, %c0_3] : memref<32x32xbf16, #tpu.memory_space<vmem>>, vector<32x32xbf16>
    %cst = arith.constant dense<0.000000e+00> : vector<16x32xf32>
    %3 = tpu.matmul %1, %2, %cst {dimension_numbers = #tpu.dot_dimension_numbers<[1], [0], [0], [1], [0, 0, 1, 1], [], []>} : vector<16x32xbf16>, vector<32x32xbf16>, vector<16x32xf32> -> vector<16x32xf32>
    %4 = arith.truncf %3 : vector<16x32xf32> to vector<16x32xbf16>
    %c0_4 = arith.constant 0 : index
    %c0_5 = arith.constant 0 : index
    %5 = vector.load %arg11[%c0_4, %c0_5] : memref<16x32xbf16, #tpu.memory_space<vmem>>, vector<16x32xbf16>
    tpu.vector_store %arg11[%c0_4, %c0_5], %4 {strides = array<i32>} : memref<16x32xbf16, #tpu.memory_space<vmem>>, vector<16x32xbf16>,
    %c0_6 = arith.constant 0 : index
    %c0_7 = arith.constant 0 : index
    %c0_8 = arith.constant 0 : index
    %6 = vector.load %arg3[%c0_6, %c0_7, %c0_8] : memref<1x16x32xbf16, #tpu.memory_space<vmem>>, vector<1x16x32xbf16>
    %7 = vector.shape_cast %6 : vector<1x16x32xbf16> to vector<16x32xbf16>
    %c0_9 = arith.constant 0 : index
    %c0_10 = arith.constant 0 : index
    %8 = vector.load %arg7[%c0_9, %c0_10] : memref<32x64xbf16, #tpu.memory_space<vmem>>, vector<32x64xbf16>
    %cst_11 = arith.constant dense<0.000000e+00> : vector<16x64xf32>
    %9 = tpu.matmul %7, %8, %cst_11 {dimension_numbers = #tpu.dot_dimension_numbers<[1], [0], [0], [1], [0, 0, 1, 1], [], []>} : vector<16x32xbf16>, vector<32x64xbf16>, vector<16x64xf32> -> vector<16x64xf32>
    %10 = arith.truncf %9 : vector<16x64xf32> to vector<16x64xbf16>
    %c0_12 = arith.constant 0 : index
    %c0_13 = arith.constant 0 : index
    %11 = vector.load %arg12[%c0_12, %c0_13] : memref<16x64xbf16, #tpu.memory_space<vmem>>, vector<16x64xbf16>
    tpu.vector_store %arg12[%c0_12, %c0_13], %10 {strides = array<i32>} : memref<16x64xbf16, #tpu.memory_space<vmem>>, vector<16x64xbf16>,
    %c0_14 = arith.constant 0 : index
    %c0_15 = arith.constant 0 : index
    %c0_16 = arith.constant 0 : index
    %12 = vector.load %arg4[%c0_14, %c0_15, %c0_16] : memref<1x16x16xf32, #tpu.memory_space<vmem>>, vector<1x16x16xf32>
    %13 = vector.shape_cast %12 : vector<1x16x16xf32> to vector<16x16xf32>
    %c0_17 = arith.constant 0 : index
    %c0_18 = arith.constant 0 : index
    %c0_19 = arith.constant 0 : index
    %14 = vector.load %arg5[%c0_17, %c0_18, %c0_19] : memref<1x1x16xf32, #tpu.memory_space<vmem>>, vector<1x1x16xf32>
    %15 = vector.shape_cast %14 : vector<1x1x16xf32> to vector<1x16xf32>
    %16 = vector.broadcast %15 : vector<1x16xf32> to vector<16x16xf32>
    %17 = arith.addf %13, %16 : vector<16x16xf32>
    %cst_20 = arith.constant 0.000000e+00 : f32
    %18 = vector.broadcast %cst_20 : f32 to vector<16x16xf32>
    %19 = arith.cmpf ogt, %17, %18 : vector<16x16xf32>
    %c0_21 = arith.constant 0 : index
    %c0_22 = arith.constant 0 : index
    %20 = vector.load %arg11[%c0_21, %c0_22] : memref<16x32xbf16, #tpu.memory_space<vmem>>, vector<16x8xbf16>
    %c0_23 = arith.constant 0 : index
    %c0_24 = arith.constant 0 : index
    %21 = vector.load %arg12[%c0_23, %c0_24] : memref<16x64xbf16, #tpu.memory_space<vmem>>, vector<16x8xbf16>
    %c0_25 = arith.constant 0 : index
    %c32 = arith.constant 32 : index
    %22 = vector.load %arg12[%c0_25, %c32] : memref<16x64xbf16, #tpu.memory_space<vmem>>, vector<16x8xbf16>
    %cst_26 = arith.constant dense<0.000000e+00> : vector<16x16xf32>
    %23 = tpu.matmul %20, %21, %cst_26 {dimension_numbers = #tpu.dot_dimension_numbers<[1], [1], [0], [0], [0, 0, 1, 0], [], []>} : vector<16x8xbf16>, vector<16x8xbf16>, vector<16x16xf32> -> vector<16x16xf32>
    %cst_27 = arith.constant 0.353553385 : f32
    %24 = vector.broadcast %cst_27 : f32 to vector<16x16xf32>
    %25 = arith.mulf %24, %23 : vector<16x16xf32>
    %cst_28 = arith.constant -1.000000e+08 : f32
    %26 = vector.broadcast %cst_28 : f32 to vector<16x16xf32>
    %27 = arith.select %19, %26, %25 : vector<16x16xi1>, vector<16x16xf32>
    %cst_29 = arith.constant dense<0xFF800000> : vector<16xf32>
    %28 = vector.multi_reduction <maximumf>, %27, %cst_29 [1] : vector<16x16xf32> to vector<16xf32>
    %29 = vector.shape_cast %28 : vector<16xf32> to vector<16x1xf32>
    %30 = vector.broadcast %29 : vector<16x1xf32> to vector<16x16xf32>
    %31 = arith.subf %27, %30 : vector<16x16xf32>
    %32 = math.exp %31 : vector<16x16xf32>
    %cst_30 = arith.constant dense<0.000000e+00> : vector<16xf32>
    %33 = vector.multi_reduction <add>, %32, %cst_30 [1] : vector<16x16xf32> to vector<16xf32>
    %34 = vector.shape_cast %33 : vector<16xf32> to vector<16x1xf32>
    %cst_31 = arith.constant 1.000000e+00 : f32
    %35 = vector.broadcast %cst_31 : f32 to vector<16x1xf32>
    %36 = arith.divf %35, %34 : vector<16x1xf32>
    %37 = vector.broadcast %36 : vector<16x1xf32> to vector<16x16xf32>
    %38 = arith.mulf %32, %37 : vector<16x16xf32>
    %c0_32 = arith.constant 0 : index
    %c0_33 = arith.constant 0 : index
    %c0_34 = arith.constant 0 : index
    %c0_35 = arith.constant 0 : index
    %39 = vector.load %arg10[%c0_32, %c0_33, %c0_34, %c0_35] : memref<4x1x16x16xf32, #tpu.memory_space<vmem>>, vector<1x1x16x16xf32>
    %40 = vector.shape_cast %39 : vector<1x1x16x16xf32> to vector<16x16xf32>
    %41 = vector.shape_cast %38 : vector<16x16xf32> to vector<1x1x16x16xf32>
    tpu.vector_store %arg10[%c0_32, %c0_33, %c0_34, %c0_35], %41 {strides = array<i32>} : memref<4x1x16x16xf32, #tpu.memory_space<vmem>>, vector<1x1x16x16xf32>,
    %42 = arith.truncf %38 : vector<16x16xf32> to vector<16x16xbf16>
    %cst_36 = arith.constant dense<0.000000e+00> : vector<16x8xf32>
    %43 = tpu.matmul %42, %22, %cst_36 {dimension_numbers = #tpu.dot_dimension_numbers<[1], [0], [0], [1], [0, 0, 1, 1], [], []>} : vector<16x16xbf16>, vector<16x8xbf16>, vector<16x8xf32> -> vector<16x8xf32>
    %44 = arith.truncf %43 : vector<16x8xf32> to vector<16x8xbf16>
    %c0_37 = arith.constant 0 : index
    %c0_38 = arith.constant 0 : index
    %45 = vector.load %arg13[%c0_37, %c0_38] : memref<16x32xbf16, #tpu.memory_space<vmem>>, vector<16x8xbf16>
    tpu.vector_store %arg13[%c0_37, %c0_38], %44 {strides = array<i32>} : memref<16x32xbf16, #tpu.memory_space<vmem>>, vector<16x8xbf16>,
    %c0_39 = arith.constant 0 : index
    %c8 = arith.constant 8 : index
    %46 = vector.load %arg11[%c0_39, %c8] : memref<16x32xbf16, #tpu.memory_space<vmem>>, vector<16x8xbf16>
    %c0_40 = arith.constant 0 : index
    %c8_41 = arith.constant 8 : index
    %47 = vector.load %arg12[%c0_40, %c8_41] : memref<16x64xbf16, #tpu.memory_space<vmem>>, vector<16x8xbf16>
    %c0_42 = arith.constant 0 : index
    %c40 = arith.constant 40 : index
    %48 = vector.load %arg12[%c0_42, %c40] : memref<16x64xbf16, #tpu.memory_space<vmem>>, vector<16x8xbf16>
    %cst_43 = arith.constant dense<0.000000e+00> : vector<16x16xf32>
    %49 = tpu.matmul %46, %47, %cst_43 {dimension_numbers = #tpu.dot_dimension_numbers<[1], [1], [0], [0], [0, 0, 1, 0], [], []>} : vector<16x8xbf16>, vector<16x8xbf16>, vector<16x16xf32> -> vector<16x16xf32>
    %cst_44 = arith.constant 0.353553385 : f32
    %50 = vector.broadcast %cst_44 : f32 to vector<16x16xf32>
    %51 = arith.mulf %50, %49 : vector<16x16xf32>
    %cst_45 = arith.constant -1.000000e+08 : f32
    %52 = vector.broadcast %cst_45 : f32 to vector<16x16xf32>
    %53 = arith.select %19, %52, %51 : vector<16x16xi1>, vector<16x16xf32>
    %cst_46 = arith.constant dense<0xFF800000> : vector<16xf32>
    %54 = vector.multi_reduction <maximumf>, %53, %cst_46 [1] : vector<16x16xf32> to vector<16xf32>
    %55 = vector.shape_cast %54 : vector<16xf32> to vector<16x1xf32>
    %56 = vector.broadcast %55 : vector<16x1xf32> to vector<16x16xf32>
    %57 = arith.subf %53, %56 : vector<16x16xf32>
    %58 = math.exp %57 : vector<16x16xf32>
    %cst_47 = arith.constant dense<0.000000e+00> : vector<16xf32>
    %59 = vector.multi_reduction <add>, %58, %cst_47 [1] : vector<16x16xf32> to vector<16xf32>
    %60 = vector.shape_cast %59 : vector<16xf32> to vector<16x1xf32>
    %cst_48 = arith.constant 1.000000e+00 : f32
    %61 = vector.broadcast %cst_48 : f32 to vector<16x1xf32>
    %62 = arith.divf %61, %60 : vector<16x1xf32>
    %63 = vector.broadcast %62 : vector<16x1xf32> to vector<16x16xf32>
    %64 = arith.mulf %58, %63 : vector<16x16xf32>
    %c1 = arith.constant 1 : index
    %c0_49 = arith.constant 0 : index
    %c0_50 = arith.constant 0 : index
    %c0_51 = arith.constant 0 : index
    %65 = vector.load %arg10[%c1, %c0_49, %c0_50, %c0_51] : memref<4x1x16x16xf32, #tpu.memory_space<vmem>>, vector<1x1x16x16xf32>
    %66 = vector.shape_cast %65 : vector<1x1x16x16xf32> to vector<16x16xf32>
    %67 = vector.shape_cast %64 : vector<16x16xf32> to vector<1x1x16x16xf32>
    tpu.vector_store %arg10[%c1, %c0_49, %c0_50, %c0_51], %67 {strides = array<i32>} : memref<4x1x16x16xf32, #tpu.memory_space<vmem>>, vector<1x1x16x16xf32>,
    %68 = arith.truncf %64 : vector<16x16xf32> to vector<16x16xbf16>
    %cst_52 = arith.constant dense<0.000000e+00> : vector<16x8xf32>
    %69 = tpu.matmul %68, %48, %cst_52 {dimension_numbers = #tpu.dot_dimension_numbers<[1], [0], [0], [1], [0, 0, 1, 1], [], []>} : vector<16x16xbf16>, vector<16x8xbf16>, vector<16x8xf32> -> vector<16x8xf32>
    %70 = arith.truncf %69 : vector<16x8xf32> to vector<16x8xbf16>
    %c0_53 = arith.constant 0 : index
    %c8_54 = arith.constant 8 : index
    %71 = vector.load %arg13[%c0_53, %c8_54] : memref<16x32xbf16, #tpu.memory_space<vmem>>, vector<16x8xbf16>
    tpu.vector_store %arg13[%c0_53, %c8_54], %70 {strides = array<i32>} : memref<16x32xbf16, #tpu.memory_space<vmem>>, vector<16x8xbf16>,
    %c0_55 = arith.constant 0 : index
    %c16 = arith.constant 16 : index
    %72 = vector.load %arg11[%c0_55, %c16] : memref<16x32xbf16, #tpu.memory_space<vmem>>, vector<16x8xbf16>
    %c0_56 = arith.constant 0 : index
    %c16_57 = arith.constant 16 : index
    %73 = vector.load %arg12[%c0_56, %c16_57] : memref<16x64xbf16, #tpu.memory_space<vmem>>, vector<16x8xbf16>
    %c0_58 = arith.constant 0 : index
    %c48 = arith.constant 48 : index
    %74 = vector.load %arg12[%c0_58, %c48] : memref<16x64xbf16, #tpu.memory_space<vmem>>, vector<16x8xbf16>
    %cst_59 = arith.constant dense<0.000000e+00> : vector<16x16xf32>
    %75 = tpu.matmul %72, %73, %cst_59 {dimension_numbers = #tpu.dot_dimension_numbers<[1], [1], [0], [0], [0, 0, 1, 0], [], []>} : vector<16x8xbf16>, vector<16x8xbf16>, vector<16x16xf32> -> vector<16x16xf32>
    %cst_60 = arith.constant 0.353553385 : f32
    %76 = vector.broadcast %cst_60 : f32 to vector<16x16xf32>
    %77 = arith.mulf %76, %75 : vector<16x16xf32>
    %cst_61 = arith.constant -1.000000e+08 : f32
    %78 = vector.broadcast %cst_61 : f32 to vector<16x16xf32>
    %79 = arith.select %19, %78, %77 : vector<16x16xi1>, vector<16x16xf32>
    %cst_62 = arith.constant dense<0xFF800000> : vector<16xf32>
    %80 = vector.multi_reduction <maximumf>, %79, %cst_62 [1] : vector<16x16xf32> to vector<16xf32>
    %81 = vector.shape_cast %80 : vector<16xf32> to vector<16x1xf32>
    %82 = vector.broadcast %81 : vector<16x1xf32> to vector<16x16xf32>
    %83 = arith.subf %79, %82 : vector<16x16xf32>
    %84 = math.exp %83 : vector<16x16xf32>
    %cst_63 = arith.constant dense<0.000000e+00> : vector<16xf32>
    %85 = vector.multi_reduction <add>, %84, %cst_63 [1] : vector<16x16xf32> to vector<16xf32>
    %86 = vector.shape_cast %85 : vector<16xf32> to vector<16x1xf32>
    %cst_64 = arith.constant 1.000000e+00 : f32
    %87 = vector.broadcast %cst_64 : f32 to vector<16x1xf32>
    %88 = arith.divf %87, %86 : vector<16x1xf32>
    %89 = vector.broadcast %88 : vector<16x1xf32> to vector<16x16xf32>
    %90 = arith.mulf %84, %89 : vector<16x16xf32>
    %c2 = arith.constant 2 : index
    %c0_65 = arith.constant 0 : index
    %c0_66 = arith.constant 0 : index
    %c0_67 = arith.constant 0 : index
    %91 = vector.load %arg10[%c2, %c0_65, %c0_66, %c0_67] : memref<4x1x16x16xf32, #tpu.memory_space<vmem>>, vector<1x1x16x16xf32>
    %92 = vector.shape_cast %91 : vector<1x1x16x16xf32> to vector<16x16xf32>
    %93 = vector.shape_cast %90 : vector<16x16xf32> to vector<1x1x16x16xf32>
    tpu.vector_store %arg10[%c2, %c0_65, %c0_66, %c0_67], %93 {strides = array<i32>} : memref<4x1x16x16xf32, #tpu.memory_space<vmem>>, vector<1x1x16x16xf32>,
    %94 = arith.truncf %90 : vector<16x16xf32> to vector<16x16xbf16>
    %cst_68 = arith.constant dense<0.000000e+00> : vector<16x8xf32>
    %95 = tpu.matmul %94, %74, %cst_68 {dimension_numbers = #tpu.dot_dimension_numbers<[1], [0], [0], [1], [0, 0, 1, 1], [], []>} : vector<16x16xbf16>, vector<16x8xbf16>, vector<16x8xf32> -> vector<16x8xf32>
    %96 = arith.truncf %95 : vector<16x8xf32> to vector<16x8xbf16>
    %c0_69 = arith.constant 0 : index
    %c16_70 = arith.constant 16 : index
    %97 = vector.load %arg13[%c0_69, %c16_70] : memref<16x32xbf16, #tpu.memory_space<vmem>>, vector<16x8xbf16>
    tpu.vector_store %arg13[%c0_69, %c16_70], %96 {strides = array<i32>} : memref<16x32xbf16, #tpu.memory_space<vmem>>, vector<16x8xbf16>,
    %c0_71 = arith.constant 0 : index
    %c24 = arith.constant 24 : index
    %98 = vector.load %arg11[%c0_71, %c24] : memref<16x32xbf16, #tpu.memory_space<vmem>>, vector<16x8xbf16>
    %c0_72 = arith.constant 0 : index
    %c24_73 = arith.constant 24 : index
    %99 = vector.load %arg12[%c0_72, %c24_73] : memref<16x64xbf16, #tpu.memory_space<vmem>>, vector<16x8xbf16>
    %c0_74 = arith.constant 0 : index
    %c56 = arith.constant 56 : index
    %100 = vector.load %arg12[%c0_74, %c56] : memref<16x64xbf16, #tpu.memory_space<vmem>>, vector<16x8xbf16>
    %cst_75 = arith.constant dense<0.000000e+00> : vector<16x16xf32>
    %101 = tpu.matmul %98, %99, %cst_75 {dimension_numbers = #tpu.dot_dimension_numbers<[1], [1], [0], [0], [0, 0, 1, 0], [], []>} : vector<16x8xbf16>, vector<16x8xbf16>, vector<16x16xf32> -> vector<16x16xf32>
    %cst_76 = arith.constant 0.353553385 : f32
    %102 = vector.broadcast %cst_76 : f32 to vector<16x16xf32>
    %103 = arith.mulf %102, %101 : vector<16x16xf32>
    %cst_77 = arith.constant -1.000000e+08 : f32
    %104 = vector.broadcast %cst_77 : f32 to vector<16x16xf32>
    %105 = arith.select %19, %104, %103 : vector<16x16xi1>, vector<16x16xf32>
    %cst_78 = arith.constant dense<0xFF800000> : vector<16xf32>
    %106 = vector.multi_reduction <maximumf>, %105, %cst_78 [1] : vector<16x16xf32> to vector<16xf32>
    %107 = vector.shape_cast %106 : vector<16xf32> to vector<16x1xf32>
    %108 = vector.broadcast %107 : vector<16x1xf32> to vector<16x16xf32>
    %109 = arith.subf %105, %108 : vector<16x16xf32>
    %110 = math.exp %109 : vector<16x16xf32>
    %cst_79 = arith.constant dense<0.000000e+00> : vector<16xf32>
    %111 = vector.multi_reduction <add>, %110, %cst_79 [1] : vector<16x16xf32> to vector<16xf32>
    %112 = vector.shape_cast %111 : vector<16xf32> to vector<16x1xf32>
    %cst_80 = arith.constant 1.000000e+00 : f32
    %113 = vector.broadcast %cst_80 : f32 to vector<16x1xf32>
    %114 = arith.divf %113, %112 : vector<16x1xf32>
    %115 = vector.broadcast %114 : vector<16x1xf32> to vector<16x16xf32>
    %116 = arith.mulf %110, %115 : vector<16x16xf32>
    %c3 = arith.constant 3 : index
    %c0_81 = arith.constant 0 : index
    %c0_82 = arith.constant 0 : index
    %c0_83 = arith.constant 0 : index
    %117 = vector.load %arg10[%c3, %c0_81, %c0_82, %c0_83] : memref<4x1x16x16xf32, #tpu.memory_space<vmem>>, vector<1x1x16x16xf32>
    %118 = vector.shape_cast %117 : vector<1x1x16x16xf32> to vector<16x16xf32>
    %119 = vector.shape_cast %116 : vector<16x16xf32> to vector<1x1x16x16xf32>
    tpu.vector_store %arg10[%c3, %c0_81, %c0_82, %c0_83], %119 {strides = array<i32>} : memref<4x1x16x16xf32, #tpu.memory_space<vmem>>, vector<1x1x16x16xf32>,
    %120 = arith.truncf %116 : vector<16x16xf32> to vector<16x16xbf16>
    %cst_84 = arith.constant dense<0.000000e+00> : vector<16x8xf32>
    %121 = tpu.matmul %120, %100, %cst_84 {dimension_numbers = #tpu.dot_dimension_numbers<[1], [0], [0], [1], [0, 0, 1, 1], [], []>} : vector<16x16xbf16>, vector<16x8xbf16>, vector<16x8xf32> -> vector<16x8xf32>
    %122 = arith.truncf %121 : vector<16x8xf32> to vector<16x8xbf16>
    %c0_85 = arith.constant 0 : index
    %c24_86 = arith.constant 24 : index
    %123 = vector.load %arg13[%c0_85, %c24_86] : memref<16x32xbf16, #tpu.memory_space<vmem>>, vector<16x8xbf16>
    tpu.vector_store %arg13[%c0_85, %c24_86], %122 {strides = array<i32>} : memref<16x32xbf16, #tpu.memory_space<vmem>>, vector<16x8xbf16>,
    %c0_87 = arith.constant 0 : index
    %c0_88 = arith.constant 0 : index
    %124 = vector.load %arg13[%c0_87, %c0_88] : memref<16x32xbf16, #tpu.memory_space<vmem>>, vector<16x32xbf16>
    %c0_89 = arith.constant 0 : index
    %c0_90 = arith.constant 0 : index
    %125 = vector.load %arg8[%c0_89, %c0_90] : memref<32x32xbf16, #tpu.memory_space<vmem>>, vector<32x32xbf16>
    %cst_91 = arith.constant dense<0.000000e+00> : vector<16x32xf32>
    %126 = tpu.matmul %124, %125, %cst_91 {dimension_numbers = #tpu.dot_dimension_numbers<[1], [0], [0], [1], [0, 0, 1, 1], [], []>} : vector<16x32xbf16>, vector<32x32xbf16>, vector<16x32xf32> -> vector<16x32xf32>
    %c0_92 = arith.constant 0 : index
    %c0_93 = arith.constant 0 : index
    %c0_94 = arith.constant 0 : index
    %127 = vector.load %arg9[%c0_92, %c0_93, %c0_94] : memref<1x16x32xf32, #tpu.memory_space<vmem>>, vector<1x16x32xf32>
    %128 = vector.shape_cast %127 : vector<1x16x32xf32> to vector<16x32xf32>
    %129 = vector.shape_cast %126 : vector<16x32xf32> to vector<1x16x32xf32>
    tpu.vector_store %arg9[%c0_92, %c0_93, %c0_94], %129 {strides = array<i32>} : memref<1x16x32xf32, #tpu.memory_space<vmem>>, vector<1x16x32xf32>,
    return
  }
  func.func @transform_0(%arg0: i32, %arg1: i32) -> (i32, i32, i32) {
    %c0_i32 = arith.constant 0 : i32
    %c0_i32_0 = arith.constant 0 : i32
    return %arg0, %arg1, %c0_i32 : i32, i32, i32
  }
  func.func @transform_1(%arg0: i32, %arg1: i32) -> (i32, i32, i32) {
    %c0_i32 = arith.constant 0 : i32
    %c0_i32_0 = arith.constant 0 : i32
    %c0_i32_1 = arith.constant 0 : i32
    return %arg0, %c0_i32, %c0_i32_0 : i32, i32, i32
  }
  func.func @transform_2(%arg0: i32, %arg1: i32) -> (i32, i32, i32) {
    %c0_i32 = arith.constant 0 : i32
    %c0_i32_0 = arith.constant 0 : i32
    return %arg0, %arg1, %c0_i32 : i32, i32, i32
  }
  func.func @transform_3(%arg0: i32, %arg1: i32) -> (i32, i32, i32) {
    %c0_i32 = arith.constant 0 : i32
    %c0_i32_0 = arith.constant 0 : i32
    %c0_i32_1 = arith.constant 0 : i32
    return %arg0, %c0_i32, %c0_i32_0 : i32, i32, i32
  }
  func.func @transform_4(%arg0: i32, %arg1: i32) -> (i32, i32) {
    %c0_i32 = arith.constant 0 : i32
    %c0_i32_0 = arith.constant 0 : i32
    %c0_i32_1 = arith.constant 0 : i32
    return %c0_i32, %c0_i32_0 : i32, i32
  }
  func.func @transform_5(%arg0: i32, %arg1: i32) -> (i32, i32) {
    %c0_i32 = arith.constant 0 : i32
    %c0_i32_0 = arith.constant 0 : i32
    %c0_i32_1 = arith.constant 0 : i32
    return %c0_i32, %c0_i32_0 : i32, i32
  }
  func.func @transform_6(%arg0: i32, %arg1: i32) -> (i32, i32) {
    %c0_i32 = arith.constant 0 : i32
    %c0_i32_0 = arith.constant 0 : i32
    %c0_i32_1 = arith.constant 0 : i32
    return %c0_i32, %c0_i32_0 : i32, i32
  }
  func.func @transform_7(%arg0: i32, %arg1: i32) -> (i32, i32, i32) {
    %c0_i32 = arith.constant 0 : i32
    %c0_i32_0 = arith.constant 0 : i32
    return %arg0, %arg1, %c0_i32 : i32, i32, i32
  }
  func.func @transform_8(%arg0: i32, %arg1: i32) -> (i32, i32, i32, i32) {
    %c0_i32 = arith.constant 0 : i32
    %c0_i32_0 = arith.constant 0 : i32
    %c0_i32_1 = arith.constant 0 : i32
    return %c0_i32, %arg0, %arg1, %c0_i32_0 : i32, i32, i32, i32
  }
}

</mosaic_0001>

<llo_original>
// kernel: tpu_custom_call.1
$region0: #{tpu_custom_call.1}
  #allocation0 [shape = 'u32[]', space=smem, size = 0x4, offset = 0x4, fixed_abs, tag = 'smem constant byte address 0x4 - core index']
  #allocation1 [shape = 'u32[144,128]{1,0:T(1,128)}', space=vmem, size = 0x12000, scoped, tag = 'internal scratch']
  #allocation2 [shape = 'bf16[16,32]{1,0:T(8,128)(2,1)}', space=vmem, size = 0x1000, scoped, tag = 'scratch operand']
  #allocation3 [shape = 'bf16[16,64]{1,0:T(8,128)(2,1)}', space=vmem, size = 0x1000, scoped, tag = 'scratch operand']
  #allocation4 [shape = 'bf16[16,32]{1,0:T(8,128)(2,1)}', space=vmem, size = 0x1000, scoped, tag = 'scratch operand']
  #allocation19 [shape = 's32[]', space=sflag, size = 0x4, offset = 0, fixed_abs, tag = 'sflag constant byte address 0x0 - dummy sync flag']
  %s0 = inlined_call_operand.hbm [shape: bf16[2,16,32], index: 0, kind: input, shape index: {}]
  %s1 = inlined_call_operand.hbm [shape: bf16[2,16,32], index: 1, kind: input, shape index: {}]
  %s2 = inlined_call_operand.hbm [shape: f32[2,16,16], index: 2, kind: input, shape index: {}]
  %s3 = inlined_call_operand.vmem [shape: f32[2,1,16], index: 3, kind: input, shape index: {}]
  %s4 = inlined_call_operand.hbm [shape: bf16[32,32], index: 4, kind: input, shape index: {}]
  %s5 = inlined_call_operand.hbm [shape: bf16[32,64], index: 5, kind: input, shape index: {}]
  %s6 = inlined_call_operand.hbm [shape: bf16[32,32], index: 6, kind: input, shape index: {}]
  %s7 = inlined_call_operand.hbm [shape: f32[2,16,32], index: 7, kind: output, shape index: {0}]
  %s8 = inlined_call_operand.hbm [shape: f32[4,2,16,16], index: 8, kind: output, shape index: {1}]
  %9 = xla_tuple %s7, %s8
  %s10 = sld [smem:[#allocation0]]
  $region93: #{tpu_custom_call.1} parent=0
    _
  %s12 = ssub.s32 1, %s10
  %s13 = scalar_select 0, %s12, %s10
  $region1: #{tpu_custom_call.1} parent=0
    #allocation5 [shape = 'u8[8192]{0}', space=vmem, size = 0x2000, scoped, tag = 'input window, operand 0']
    #allocation6 [shape = 's32[2]{0}', space=sflag, size = 0x8, scoped, tag = 'scoped memory for tpu_custom_call.1']
    #allocation7 [shape = 's32[2]{0}', space=sflag, size = 0x8, scoped, tag = 'scoped memory for tpu_custom_call.1']
    #allocation8 [shape = 'u8[8192]{0}', space=vmem, size = 0x2000, scoped, tag = 'input window, operand 1']
    #allocation9 [shape = 's32[2]{0}', space=sflag, size = 0x8, scoped, tag = 'scoped memory for tpu_custom_call.1']
    #allocation10 [shape = 'u8[16384]{0}', space=vmem, size = 0x4000, scoped, tag = 'input window, operand 2']
    #allocation11 [shape = 'u8[8192]{0}', space=vmem, size = 0x2000, scoped, tag = 'input window, operand 4, single buffered']
    #allocation12 [shape = 's32[1]{0}', space=sflag, size = 0x4, scoped, tag = 'scoped memory for tpu_custom_call.1']
    #allocation13 [shape = 'u8[8192]{0}', space=vmem, size = 0x2000, scoped, tag = 'input window, operand 5, single buffered']
    #allocation14 [shape = 'u8[8192]{0}', space=vmem, size = 0x2000, scoped, tag = 'input window, operand 6, single buffered']
    #allocation15 [shape = 's32[1]{0}', space=sflag, size = 0x4, scoped, tag = 'scoped memory for tpu_custom_call.1']
    #allocation16 [shape = 'u8[16384]{0}', space=vmem, size = 0x4000, scoped, tag = 'output window, operand 0']
    #allocation17 [shape = 'u8[65536]{0}', space=vmem, size = 0x10000, scoped, tag = 'output window, operand 1']
    #allocation18 [shape = 's32[2]{0}', space=sflag, size = 0x8, scoped, tag = 'scoped memory for tpu_custom_call.1']
    %14 = vsyncpa [#allocation6], 0
    %s15 = scalar_lea.sflag [#allocation6], 1
    %16 = vsyncpa %s15, 0
    %17 = vsyncpa [#allocation9], 0
    %s18 = scalar_lea.sflag [#allocation9], 1
    %19 = vsyncpa %s18, 0
    %20 = vsyncpa [#allocation12], 0
    %21 = vsyncpa [#allocation15], 0
    %22 = vsyncpa [#allocation7], 0
    %s23 = scalar_lea.sflag [#allocation7], 1
    %24 = vsyncpa %s23, 0
    %25 = vsyncpa [#allocation18], 0
    %s26 = scalar_lea.sflag [#allocation18], 1
    %27 = vsyncpa %s26, 0
    loop: start=0, step=1, limit=4
    $region2: #{tpu_custom_call.1} parent=1 // loop_pre_header
      _
    $region3: #{tpu_custom_call.1} parent=1 // loop_header
      %s29 = sphi 0, %s33
      %p30 = scmp.ge.s32.totalorder %s29, 4
      %s36 = sphi 0, %s48
      %s37 = sphi 0, %s44
      %s38 = sphi 0, %s36
      %s39 = sphi 0, %s37
      %s40 = sphi 0, %s38
      %s41 = sphi 0, %s39
      %s53 = sphi 0, %s55
      %s56 = sphi 0, %s53
      %s57 = sphi 0, %s56
      %s73 = sphi 0, %s57
      %s79 = sphi 0, %s81
      %s82 = sphi 0, %s79
      %s83 = sphi 0, %s82
      %s99 = sphi 0, %s83
      %s107 = sphi 0, %s109
      %s110 = sphi 0, %s107
      %s111 = sphi 0, %s110
      %s127 = sphi 0, %s111
      %s133 = sphi 0, %s135
      %s136 = sphi 0, %s133
      %s137 = sphi 0, %s136
      %s153 = sphi 0, %s137
      %s157 = sphi 0, %s157
      %s159 = sphi 0, %s157
      %s160 = sphi 0, %s159
      %s174 = sphi 0, %s160
      %s178 = sphi 0, %s178
      %s180 = sphi 0, %s178
      %s181 = sphi 0, %s180
      %s195 = sphi 0, %s181
      %s199 = sphi 0, %s199
      %s201 = sphi 0, %s199
      %s202 = sphi 0, %s201
      %s216 = sphi 0, %s202
      %s224 = sphi 0, %s226
      %s227 = sphi 0, %s224
      %s228 = sphi 0, %s227
      %s244 = sphi 0, %s228
      %s252 = sphi 0, %s254
      %s255 = sphi 0, %s252
      %s256 = sphi 0, %s255
      %s272 = sphi 0, %s256
    $region4: #{tpu_custom_call.1} parent=1 // loop_header_branch
      %32 = sbr.rel (%p30) target = $region8
    $region5: #{tpu_custom_call.1} parent=1 // loop_body
      %s34 = ssub.s32 %s29, 1
      %s35 = ssub.s32 %s29, 2
      %s42 = sadd.s32 1, %s37
      %p43 = scmp.ge.s32.totalorder %s42, 1
      %s44 = scalar_select %p43, 0, %s42
      %s45 = sadd.s32 1, %s36
      %s46 = scalar_select %p43, %s45, %s36
      %p47 = scmp.ge.s32.totalorder %s46, 2
      %s48 = scalar_select %p47, 0, %s46
      %s49 = ssub.s32 %s36, %s48
      %s50 = ssub.s32 %s37, %s44
      %s51 = sor.u32 %s49, %s50
      %p52 = scmp.eq.s32.totalorder %s51, 0
      %s54 = sadd.s32 %s53, 1
      %s55 = scalar_select %p52, %s53, %s54
      %p58 = pneg %p52
      %p59 = scmp.eq.s32.totalorder %s29, 1
      %p60 = por %p58, %p59
      %p61 = scmp.ne.s32.totalorder %s53, %s56
      %p62 = scmp.eq.s32.totalorder %s29, 0
      %p63 = por %p61, %p62
      %p64 = scmp.ne.s32.totalorder %s53, %s56
      %p65 = scmp.eq.s32.totalorder %s34, 1
      %p66 = por %p64, %p65
      %p67 = scmp.ne.s32.totalorder %s56, %s57
      %p68 = scmp.eq.s32.totalorder %s34, 0
      %p69 = por %p67, %p68
      %p70 = scmp.ne.s32.totalorder %s56, %s57
      %p71 = scmp.eq.s32.totalorder %s35, 1
      %p72 = por %p70, %p71
      %p74 = scmp.ne.s32.totalorder %s57, %s73
      %p75 = scmp.eq.s32.totalorder %s35, 0
      %p76 = por %p74, %p75
      %s77 = ssub.s32 %s36, %s48
      %p78 = scmp.eq.s32.totalorder %s77, 0
      %s80 = sadd.s32 %s79, 1
      %s81 = scalar_select %p78, %s79, %s80
      %p84 = pneg %p78
      %p85 = scmp.eq.s32.totalorder %s29, 1
      %p86 = por %p84, %p85
      %p87 = scmp.ne.s32.totalorder %s79, %s82
      %p88 = scmp.eq.s32.totalorder %s29, 0
      %p89 = por %p87, %p88
      %p90 = scmp.ne.s32.totalorder %s79, %s82
      %p91 = scmp.eq.s32.totalorder %s34, 1
      %p92 = por %p90, %p91
      %p93 = scmp.ne.s32.totalorder %s82, %s83
      %p94 = scmp.eq.s32.totalorder %s34, 0
      %p95 = por %p93, %p94
      %p96 = scmp.ne.s32.totalorder %s82, %s83
      %p97 = scmp.eq.s32.totalorder %s35, 1
      %p98 = por %p96, %p97
      %p100 = scmp.ne.s32.totalorder %s83, %s99
      %p101 = scmp.eq.s32.totalorder %s35, 0
      %p102 = por %p100, %p101
      %s103 = ssub.s32 %s36, %s48
      %s104 = ssub.s32 %s37, %s44
      %s105 = sor.u32 %s103, %s104
      %p106 = scmp.eq.s32.totalorder %s105, 0
      %s108 = sadd.s32 %s107, 1
      %s109 = scalar_select %p106, %s107, %s108
      %p112 = pneg %p106
      %p113 = scmp.eq.s32.totalorder %s29, 1
      %p114 = por %p112, %p113
      %p115 = scmp.ne.s32.totalorder %s107, %s110
      %p116 = scmp.eq.s32.totalorder %s29, 0
      %p117 = por %p115, %p116
      %p118 = scmp.ne.s32.totalorder %s107, %s110
      %p119 = scmp.eq.s32.totalorder %s34, 1
      %p120 = por %p118, %p119
      %p121 = scmp.ne.s32.totalorder %s110, %s111
      %p122 = scmp.eq.s32.totalorder %s34, 0
      %p123 = por %p121, %p122
      %p124 = scmp.ne.s32.totalorder %s110, %s111
      %p125 = scmp.eq.s32.totalorder %s35, 1
      %p126 = por %p124, %p125
      %p128 = scmp.ne.s32.totalorder %s111, %s127
      %p129 = scmp.eq.s32.totalorder %s35, 0
      %p130 = por %p128, %p129
      %s131 = ssub.s32 %s36, %s48
      %p132 = scmp.eq.s32.totalorder %s131, 0
      %s134 = sadd.s32 %s133, 1
      %s135 = scalar_select %p132, %s133, %s134
      %p138 = pneg %p132
      %p139 = scmp.eq.s32.totalorder %s29, 1
      %p140 = por %p138, %p139
      %p141 = scmp.ne.s32.totalorder %s133, %s136
      %p142 = scmp.eq.s32.totalorder %s29, 0
      %p143 = por %p141, %p142
      %p144 = scmp.ne.s32.totalorder %s133, %s136
      %p145 = scmp.eq.s32.totalorder %s34, 1
      %p146 = por %p144, %p145
      %p147 = scmp.ne.s32.totalorder %s136, %s137
      %p148 = scmp.eq.s32.totalorder %s34, 0
      %p149 = por %p147, %p148
      %p150 = scmp.ne.s32.totalorder %s136, %s137
      %p151 = scmp.eq.s32.totalorder %s35, 1
      %p152 = por %p150, %p151
      %p154 = scmp.ne.s32.totalorder %s137, %s153
      %p155 = scmp.eq.s32.totalorder %s35, 0
      %p156 = por %p154, %p155
      %s158 = sadd.s32 %s157, 1
      %p161 = scmp.eq.s32.totalorder %s29, 1
      %p162 = scmp.ne.s32.totalorder %s157, %s159
      %p163 = scmp.eq.s32.totalorder %s29, 0
      %p164 = por %p162, %p163
      %p165 = scmp.ne.s32.totalorder %s157, %s159
      %p166 = scmp.eq.s32.totalorder %s34, 1
      %p167 = por %p165, %p166
      %p168 = scmp.ne.s32.totalorder %s159, %s160
      %p169 = scmp.eq.s32.totalorder %s34, 0
      %p170 = por %p168, %p169
      %p171 = scmp.ne.s32.totalorder %s159, %s160
      %p172 = scmp.eq.s32.totalorder %s35, 1
      %p173 = por %p171, %p172
      %p175 = scmp.ne.s32.totalorder %s160, %s174
      %p176 = scmp.eq.s32.totalorder %s35, 0
      %p177 = por %p175, %p176
      %s179 = sadd.s32 %s178, 1
      %p182 = scmp.eq.s32.totalorder %s29, 1
      %p183 = scmp.ne.s32.totalorder %s178, %s180
      %p184 = scmp.eq.s32.totalorder %s29, 0
      %p185 = por %p183, %p184
      %p186 = scmp.ne.s32.totalorder %s178, %s180
      %p187 = scmp.eq.s32.totalorder %s34, 1
      %p188 = por %p186, %p187
      %p189 = scmp.ne.s32.totalorder %s180, %s181
      %p190 = scmp.eq.s32.totalorder %s34, 0
      %p191 = por %p189, %p190
      %p192 = scmp.ne.s32.totalorder %s180, %s181
      %p193 = scmp.eq.s32.totalorder %s35, 1
      %p194 = por %p192, %p193
      %p196 = scmp.ne.s32.totalorder %s181, %s195
      %p197 = scmp.eq.s32.totalorder %s35, 0
      %p198 = por %p196, %p197
      %s200 = sadd.s32 %s199, 1
      %p203 = scmp.eq.s32.totalorder %s29, 1
      %p204 = scmp.ne.s32.totalorder %s199, %s201
      %p205 = scmp.eq.s32.totalorder %s29, 0
      %p206 = por %p204, %p205
      %p207 = scmp.ne.s32.totalorder %s199, %s201
      %p208 = scmp.eq.s32.totalorder %s34, 1
      %p209 = por %p207, %p208
      %p210 = scmp.ne.s32.totalorder %s201, %s202
      %p211 = scmp.eq.s32.totalorder %s34, 0
      %p212 = por %p210, %p211
      %p213 = scmp.ne.s32.totalorder %s201, %s202
      %p214 = scmp.eq.s32.totalorder %s35, 1
      %p215 = por %p213, %p214
      %p217 = scmp.ne.s32.totalorder %s202, %s216
      %p218 = scmp.eq.s32.totalorder %s35, 0
      %p219 = por %p217, %p218
      %s220 = ssub.s32 %s36, %s48
      %s221 = ssub.s32 %s37, %s44
      %s222 = sor.u32 %s220, %s221
      %p223 = scmp.eq.s32.totalorder %s222, 0
      %s225 = sadd.s32 %s224, 1
      %s226 = scalar_select %p223, %s224, %s225
      %p229 = pneg %p223
      %p230 = scmp.eq.s32.totalorder %s29, 1
      %p231 = por %p229, %p230
      %p232 = scmp.ne.s32.totalorder %s224, %s227
      %p233 = scmp.eq.s32.totalorder %s29, 0
      %p234 = por %p232, %p233
      %p235 = scmp.ne.s32.totalorder %s224, %s227
      %p236 = scmp.eq.s32.totalorder %s34, 1
      %p237 = por %p235, %p236
      %p238 = scmp.ne.s32.totalorder %s227, %s228
      %p239 = scmp.eq.s32.totalorder %s34, 0
      %p240 = por %p238, %p239
      %p241 = scmp.ne.s32.totalorder %s227, %s228
      %p242 = scmp.eq.s32.totalorder %s35, 1
      %p243 = por %p241, %p242
      %p245 = scmp.ne.s32.totalorder %s228, %s244
      %p246 = scmp.eq.s32.totalorder %s35, 0
      %p247 = por %p245, %p246
      %s248 = ssub.s32 %s36, %s48
      %s249 = ssub.s32 %s37, %s44
      %s250 = sor.u32 %s248, %s249
      %p251 = scmp.eq.s32.totalorder %s250, 0
      %s253 = sadd.s32 %s252, 1
      %s254 = scalar_select %p251, %s252, %s253
      %p257 = pneg %p251
      %p258 = scmp.eq.s32.totalorder %s29, 1
      %p259 = por %p257, %p258
      %p260 = scmp.ne.s32.totalorder %s252, %s255
      %p261 = scmp.eq.s32.totalorder %s29, 0
      %p262 = por %p260, %p261
      %p263 = scmp.ne.s32.totalorder %s252, %s255
      %p264 = scmp.eq.s32.totalorder %s34, 1
      %p265 = por %p263, %p264
      %p266 = scmp.ne.s32.totalorder %s255, %s256
      %p267 = scmp.eq.s32.totalorder %s34, 0
      %p268 = por %p266, %p267
      %p269 = scmp.ne.s32.totalorder %s255, %s256
      %p270 = scmp.eq.s32.totalorder %s35, 1
      %p271 = por %p269, %p270
      %p273 = scmp.ne.s32.totalorder %s256, %s272
      %p274 = scmp.eq.s32.totalorder %s35, 0
      %p275 = por %p273, %p274
      %p276 = scmp.le.s32.totalorder 1, %s29
      %p277 = scmp.lt.s32.totalorder %s29, 3
      %p278 = pnand %p276, %p277
      %p279 = pneg %p278
      // Predicated region
      $region9: #{tpu_custom_call.1} parent=5 // pred_check
        _
      $region10: #{tpu_custom_call.1} parent=5 // pred_check_branch
        %281 = sbr.rel (%p278) target = $region12
      $region11: #{tpu_custom_call.1} parent=5 // pred_region
        %s282 = ssub.s32 %s29, 1
        // Predicated region
        $region13: #{tpu_custom_call.1} parent=11 // pred_check
          %p283 = pneg %p170
        $region14: #{tpu_custom_call.1} parent=11 // pred_check_branch
          %285 = sbr.rel (%p283) target = $region16
        $region15: #{tpu_custom_call.1} parent=11 // pred_region
          %s287 = ssub.s32 256, 256
          %288 = vsyncadd [#allocation12], %s287
          %s289 = sshll.u32 [#allocation11], 4
          %s290 = int_to_ptr.vmem [resolvable:$true] %s289
          %295 = dma.hbm_to_vmem [thread:$0]  %s4, 256, %s290, [#allocation12], 64, 64, 4
        $region16: #{tpu_custom_call.1} parent=11 // pred_fallthru
          _
        // Predicated region
        $region17: #{tpu_custom_call.1} parent=11 // pred_check
          %p296 = pneg %p191
        $region18: #{tpu_custom_call.1} parent=11 // pred_check_branch
          %298 = sbr.rel (%p296) target = $region20
        $region19: #{tpu_custom_call.1} parent=11 // pred_region
          %s300 = ssub.s32 256, 256
          %301 = vsyncadd [#allocation12], %s300
          %s302 = sshll.u32 [#allocation13], 4
          %s303 = int_to_ptr.vmem [resolvable:$true] %s302
          %308 = dma.hbm_to_vmem [thread:$0]  %s5, 256, %s303, [#allocation12], 64, 64, 4
        $region20: #{tpu_custom_call.1} parent=11 // pred_fallthru
          _
        // Predicated region
        $region21: #{tpu_custom_call.1} parent=11 // pred_check
          %p309 = pneg %p212
        $region22: #{tpu_custom_call.1} parent=11 // pred_check_branch
          %311 = sbr.rel (%p309) target = $region24
        $region23: #{tpu_custom_call.1} parent=11 // pred_region
          %s313 = ssub.s32 256, 256
          %314 = vsyncadd [#allocation15], %s313
          %s315 = sshll.u32 [#allocation14], 4
          %s316 = int_to_ptr.vmem [resolvable:$true] %s315
          %321 = dma.hbm_to_vmem [thread:$0]  %s6, 256, %s316, [#allocation15], 64, 64, 4
        $region24: #{tpu_custom_call.1} parent=11 // pred_fallthru
          _
      $region12: #{tpu_custom_call.1} parent=5 // pred_fallthru
        _
      %p322 = scmp.lt.s32.totalorder %s29, 2
      // Predicated region
      $region25: #{tpu_custom_call.1} parent=5 // pred_check
        %p323 = pneg %p322
      $region26: #{tpu_custom_call.1} parent=5 // pred_check_branch
        %325 = sbr.rel (%p323) target = $region28
      $region27: #{tpu_custom_call.1} parent=5 // pred_region
        // Predicated region
        $region29: #{tpu_custom_call.1} parent=27 // pred_check
          %p326 = pneg %p63
        $region30: #{tpu_custom_call.1} parent=27 // pred_check_branch
          %328 = sbr.rel (%p326) target = $region32
        $region31: #{tpu_custom_call.1} parent=27 // pred_region
          %s329 = sand.u32 %s53, 1
          %s330 = scalar_lea.sflag [#allocation6], %s329
          %s331 = sand.u32 %s53, 1
          %s332 = smul.addr %s331, 8
          %s333 = scalar_lea.vmem [#allocation5], %s332
          %s334 = smul.u32 2, %s37
          %s336 = ssub.s32 128, 128
          %337 = vsyncadd %s330, %s336
          %s338 = smul.addr %s36, 2
          %s339 = sadd.s32 %s334, %s338
          %s340 = smul.addr %s339, 64
          %s341 = scalar_lea.hbm %s0, %s340
          %s342 = sshll.u32 %s333, 4
          %s343 = int_to_ptr.vmem [resolvable:$true] %s342
          %348 = dma.hbm_to_vmem [thread:$0]  %s341, 128, %s343, %s330, 64, 64, 4
        $region32: #{tpu_custom_call.1} parent=27 // pred_fallthru
          _
        // Predicated region
        $region33: #{tpu_custom_call.1} parent=27 // pred_check
          %p349 = pneg %p89
        $region34: #{tpu_custom_call.1} parent=27 // pred_check_branch
          %351 = sbr.rel (%p349) target = $region36
        $region35: #{tpu_custom_call.1} parent=27 // pred_region
          %s352 = sand.u32 %s29, 1
          %s353 = scalar_lea.sflag [#allocation9], %s352
          %s354 = sand.u32 %s79, 1
          %s355 = smul.addr %s354, 8
          %s356 = scalar_lea.vmem [#allocation8], %s355
          %s358 = ssub.s32 128, 128
          %359 = vsyncadd %s353, %s358
          %s360 = smul.addr %s36, 2
          %s361 = smul.addr %s360, 64
          %s362 = scalar_lea.hbm %s1, %s361
          %s363 = sshll.u32 %s356, 4
          %s364 = int_to_ptr.vmem [resolvable:$true] %s363
          %369 = dma.hbm_to_vmem [thread:$0]  %s362, 128, %s364, %s353, 64, 64, 4
        $region36: #{tpu_custom_call.1} parent=27 // pred_fallthru
          _
        // Predicated region
        $region37: #{tpu_custom_call.1} parent=27 // pred_check
          %p370 = pneg %p117
        $region38: #{tpu_custom_call.1} parent=27 // pred_check_branch
          %372 = sbr.rel (%p370) target = $region40
        $region39: #{tpu_custom_call.1} parent=27 // pred_region
          %s373 = sand.u32 %s29, 1
          %s374 = scalar_lea.sflag [#allocation9], %s373
          %s375 = sand.u32 %s107, 1
          %s376 = smul.addr %s375, 16
          %s377 = scalar_lea.vmem [#allocation10], %s376
          %s378 = smul.u32 2, %s37
          %s380 = ssub.s32 256, 256
          %381 = vsyncadd %s374, %s380
          %s382 = smul.addr %s36, 2
          %s383 = sadd.s32 %s378, %s382
          %s384 = smul.addr %s383, 128
          %s385 = scalar_lea.hbm %s2, %s384
          %s386 = sshll.u32 %s377, 4
          %s387 = int_to_ptr.vmem [resolvable:$true] %s386
          %392 = dma.hbm_to_vmem [thread:$0]  %s385, 256, %s387, %s374, 128, 128, 8
        $region40: #{tpu_custom_call.1} parent=27 // pred_fallthru
          _
        // Predicated region
        $region41: #{tpu_custom_call.1} parent=27 // pred_check
          %p393 = pneg %p143
        $region42: #{tpu_custom_call.1} parent=27 // pred_check_branch
          %395 = sbr.rel (%p393) target = $region44
        $region43: #{tpu_custom_call.1} parent=27 // pred_region
          %p396 = scmp.lt.s32.totalorder %s36, 1
          %s397 = scalar_select %p396, %s36, 1
          %s398 = scalar_lea.vmem %s3, %s397
        $region44: #{tpu_custom_call.1} parent=27 // pred_fallthru
          _
      $region28: #{tpu_custom_call.1} parent=5 // pred_fallthru
        _
      %p399 = scmp.le.s32.totalorder 1, %s29
      %p400 = scmp.lt.s32.totalorder %s29, 3
      %p401 = pnand %p399, %p400
      %p402 = pneg %p401
      // Predicated region
      $region45: #{tpu_custom_call.1} parent=5 // pred_check
        _
      $region46: #{tpu_custom_call.1} parent=5 // pred_check_branch
        %404 = sbr.rel (%p401) target = $region48
      $region47: #{tpu_custom_call.1} parent=5 // pred_region
        %s405 = ssub.s32 %s29, 1
        %s406 = sand.u32 %s56, 1
        %s407 = scalar_lea.sflag [#allocation6], %s406
        %s408 = sand.u32 %s56, 1
        %s409 = smul.addr %s408, 8
        %s410 = scalar_lea.vmem [#allocation5], %s409
        // Predicated region
        $region49: #{tpu_custom_call.1} parent=47 // pred_check
          %p411 = pneg %p69
        $region50: #{tpu_custom_call.1} parent=47 // pred_check_branch
          %413 = sbr.rel (%p411) target = $region52
        $region51: #{tpu_custom_call.1} parent=47 // pred_region
          %414 = dma.done %s407, 128
        $region52: #{tpu_custom_call.1} parent=47 // pred_fallthru
          _
        %s415 = sand.u32 %s34, 1
        %s416 = scalar_lea.sflag [#allocation9], %s415
        %s417 = sand.u32 %s82, 1
        %s418 = smul.addr %s417, 8
        %s419 = scalar_lea.vmem [#allocation8], %s418
        // Predicated region
        $region53: #{tpu_custom_call.1} parent=47 // pred_check
          %p420 = pneg %p95
        $region54: #{tpu_custom_call.1} parent=47 // pred_check_branch
          %422 = sbr.rel (%p420) target = $region56
        $region55: #{tpu_custom_call.1} parent=47 // pred_region
          %423 = dma.done %s416, 128
        $region56: #{tpu_custom_call.1} parent=47 // pred_fallthru
          _
        %s424 = sand.u32 %s34, 1
        %s425 = scalar_lea.sflag [#allocation9], %s424
        %s426 = sand.u32 %s110, 1
        %s427 = smul.addr %s426, 16
        %s428 = scalar_lea.vmem [#allocation10], %s427
        // Predicated region
        $region57: #{tpu_custom_call.1} parent=47 // pred_check
          %p429 = pneg %p123
        $region58: #{tpu_custom_call.1} parent=47 // pred_check_branch
          %431 = sbr.rel (%p429) target = $region60
        $region59: #{tpu_custom_call.1} parent=47 // pred_region
          %432 = dma.done %s425, 256
        $region60: #{tpu_custom_call.1} parent=47 // pred_fallthru
          _
        // Predicated region
        $region61: #{tpu_custom_call.1} parent=47 // pred_check
          %p433 = pneg %p170
        $region62: #{tpu_custom_call.1} parent=47 // pred_check_branch
          %435 = sbr.rel (%p433) target = $region64
        $region63: #{tpu_custom_call.1} parent=47 // pred_region
          %436 = dma.done [#allocation12], 256
        $region64: #{tpu_custom_call.1} parent=47 // pred_fallthru
          _
        // Predicated region
        $region65: #{tpu_custom_call.1} parent=47 // pred_check
          %p437 = pneg %p191
        $region66: #{tpu_custom_call.1} parent=47 // pred_check_branch
          %439 = sbr.rel (%p437) target = $region68
        $region67: #{tpu_custom_call.1} parent=47 // pred_region
          %440 = dma.done [#allocation12], 256
        $region68: #{tpu_custom_call.1} parent=47 // pred_fallthru
          _
        // Predicated region
        $region69: #{tpu_custom_call.1} parent=47 // pred_check
          %p441 = pneg %p212
        $region70: #{tpu_custom_call.1} parent=47 // pred_check_branch
          %443 = sbr.rel (%p441) target = $region72
        $region71: #{tpu_custom_call.1} parent=47 // pred_region
          %444 = dma.done [#allocation15], 256
        $region72: #{tpu_custom_call.1} parent=47 // pred_fallthru
          _
        %s445 = sand.u32 %s56, 1
        %s446 = scalar_lea.sflag [#allocation6], %s445
        %s447 = sand.u32 %s56, 1
        %s448 = smul.addr %s447, 8
        %s449 = scalar_lea.vmem [#allocation5], %s448
        %p450 = pneg %p69
        %p451 = pneg %p66
        %s452 = sand.u32 %s34, 1
        %s453 = scalar_lea.sflag [#allocation9], %s452
        %s454 = sand.u32 %s82, 1
        %s455 = smul.addr %s454, 8
        %s456 = scalar_lea.vmem [#allocation8], %s455
        %p457 = pneg %p95
        %p458 = pneg %p92
        %s459 = sand.u32 %s34, 1
        %s460 = scalar_lea.sflag [#allocation9], %s459
        %s461 = sand.u32 %s110, 1
        %s462 = smul.addr %s461, 16
        %s463 = scalar_lea.vmem [#allocation10], %s462
        %p464 = pneg %p123
        %p465 = pneg %p120
        %p466 = scmp.lt.s32.totalorder %s38, 1
        %s467 = scalar_select %p466, %s38, 1
        %s468 = scalar_lea.vmem %s3, %s467
        %p469 = pneg %p149
        %p470 = pneg %p146
        %p471 = pneg %p170
        %p472 = pneg %p167
        %p473 = pneg %p191
        %p474 = pneg %p188
        %p475 = pneg %p212
        %p476 = pneg %p209
        %p477 = pneg %p240
        %p478 = pneg %p237
        %s479 = sand.u32 %s227, 1
        %s480 = scalar_lea.sflag [#allocation7], %s479
        %s481 = sand.u32 %s227, 1
        %s482 = smul.addr %s481, 16
        %s483 = scalar_lea.vmem [#allocation16], %s482
        %p484 = pneg %p268
        %p485 = pneg %p265
        %s486 = sand.u32 %s255, 1
        %s487 = scalar_lea.sflag [#allocation18], %s486
        %s488 = sand.u32 %s255, 1
        %s489 = smul.addr %s488, 64
        %s490 = scalar_lea.vmem [#allocation17], %s489
        %s491 = smul.u32 2, %s39
        %s492 = smul.u32 2, %s39
        %p493 = scmp.lt.s32.totalorder %s38, 1
        %s494 = scalar_select %p493, %s38, 1
        %s495 = scalar_lea.vmem %s3, %s494
        %s496 = smul.u32 2, %s39
        %s497 = smul.u32 2, %s39
        %v499 = vld [vmem:[%s410] sm:$0xf]
        %v500 = vld [vmem:[%s410 + $0x4] sm:$0xf]
        %v501 = vld [vmem:[#allocation11] sm:$0xf]
        %v502 = vld [vmem:[#allocation11 + $0x4] sm:$0xf]
        %v503 = vld [vmem:[#allocation11 + $0x8] sm:$0xf]
        %v504 = vld [vmem:[#allocation11 + $0xc] sm:$0xf]
        %v507 = vunpack.c.l.b16 %v499
        %v508 = vunpack.c.l.b16 %v500
        %v509 = vpack.c.b16 %v508, %v507
        %v514 = vunpack.c.l.b16 %v501
        %v515 = vunpack.c.l.b16 %v502
        %v516 = vunpack.c.l.b16 %v503
        %v517 = vunpack.c.l.b16 %v504
        %v518 = vpack.c.b16 %v515, %v514
        %v519 = vpack.c.b16 %v517, %v516
        %vm522 = vcmask 261120
        %v524 = vsel %vm522, %v509, 0
        %526 = vmatprep.subr.bf16.mxu0 0
        %527 = vmatpush1.bf16.msra.mxu0 0
        %528 = vmatprep.subr.bf16.mxu0 0
        %529 = vmatpush1.bf16.msra.mxu0 0
        %530 = vmatprep.subr.bf16.mxu0 0
        %531 = vmatpush1.bf16.msra.mxu0 0
        %532 = vmatprep.subr.bf16.mxu0 0
        %533 = vmatpush1.bf16.msra.mxu0 0
        %534 = vmatprep.subr.bf16.mxu0 0
        %535 = vmatpush1.bf16.msra.mxu0 0
        %536 = vmatprep.subr.bf16.mxu0 0
        %537 = vmatpush1.bf16.msra.mxu0 0
        %538 = vmatprep.subr.bf16.mxu0 0
        %539 = vmatpush1.bf16.msra.mxu0 %v519
        %540 = vmatprep.subr.bf16.mxu0 0
        %541 = vmatpush1.bf16.msra.mxu0 %v518
        %542 = vmatprep.subr.bf16.mxu0 0
        %543 = vmatpush2.bf16.msra.mxu0 0
        %544 = vmatprep.subr.bf16.mxu0 0
        %545 = vmatpush2.bf16.msra.mxu0 0
        %546 = vmatprep.subr.bf16.mxu0 0
        %547 = vmatpush2.bf16.msra.mxu0 0
        %548 = vmatprep.subr.bf16.mxu0 0
        %549 = vmatpush2.bf16.msra.mxu0 0
        %550 = vmatprep.subr.bf16.mxu0 0
        %551 = vmatpush2.bf16.msra.mxu0 0
        %552 = vmatprep.subr.bf16.mxu0 0
        %553 = vmatpush2.bf16.msra.mxu0 0
        %554 = vmatprep.subr.bf16.mxu0 0
        %555 = vmatpush2.bf16.msra.mxu0 0
        %556 = vmatprep.subr.bf16.mxu0 0
        %557 = vmatpush2.bf16.msra.mxu0 0
        %558 = vmatprep.mubr.bf16.mxu0 0
        %559 = vmatmul.mubr.bf16.gmra.mxu0 %v524
        %v560 = vpop.f32.mrf.mxu0
        %v561 = vadd.f32 0.0, %v560
        %v562 = vpop.f32.mrf.mxu0
        %v563 = vpop.f32.mrf.mxu0
        %v564 = vadd.f32 0.0, %v563
        %v565 = vpop.f32.mrf.mxu0
        %566 = vdwg.mxu0
        %v567 = vpack.c.bf16 %v564, %v561
        %v569 = vunpack.c.l.b16 %v567
        %v570 = vunpack.c.h.b16 %v567
        %v571 = vpack.c.b16 %v569, %v569
        %v572 = vpack.c.b16 %v570, %v570
        %vm575 = vcmask 257024
        %576 = vst.msk [vmem:[#allocation2] sm:$0xf] %vm575, %v571
        %577 = vst.msk [vmem:[#allocation2 + $0x4] sm:$0xf] %vm575, %v572
        %v578 = vld [vmem:[%s419] sm:$0xf]
        %v579 = vld [vmem:[%s419 + $0x4] sm:$0xf]
        %v580 = vld [vmem:[#allocation13] sm:$0xf]
        %v581 = vld [vmem:[#allocation13 + $0x4] sm:$0xf]
        %v582 = vld [vmem:[#allocation13 + $0x8] sm:$0xf]
        %v583 = vld [vmem:[#allocation13 + $0xc] sm:$0xf]
        %v586 = vunpack.c.l.b16 %v578
        %v587 = vunpack.c.l.b16 %v579
        %v588 = vpack.c.b16 %v587, %v586
        %v593 = vunpack.c.l.b16 %v580
        %v594 = vunpack.c.l.b16 %v581
        %v595 = vunpack.c.l.b16 %v582
        %v596 = vunpack.c.l.b16 %v583
        %v597 = vpack.c.b16 %v594, %v593
        %v598 = vpack.c.b16 %v596, %v595
        %v602 = vsel %vm522, %v588, 0
        %604 = vmatprep.subr.bf16.mxu0 0
        %605 = vmatpush1.bf16.msra.mxu0 0
        %606 = vmatprep.subr.bf16.mxu0 0
        %607 = vmatpush1.bf16.msra.mxu0 0
        %608 = vmatprep.subr.bf16.mxu0 0
        %609 = vmatpush1.bf16.msra.mxu0 0
        %610 = vmatprep.subr.bf16.mxu0 0
        %611 = vmatpush1.bf16.msra.mxu0 0
        %612 = vmatprep.subr.bf16.mxu0 0
        %613 = vmatpush1.bf16.msra.mxu0 0
        %614 = vmatprep.subr.bf16.mxu0 0
        %615 = vmatpush1.bf16.msra.mxu0 0
        %616 = vmatprep.subr.bf16.mxu0 0
        %617 = vmatpush1.bf16.msra.mxu0 %v598
        %618 = vmatprep.subr.bf16.mxu0 0
        %619 = vmatpush1.bf16.msra.mxu0 %v597
        %620 = vmatprep.subr.bf16.mxu0 0
        %621 = vmatpush2.bf16.msra.mxu0 0
        %622 = vmatprep.subr.bf16.mxu0 0
        %623 = vmatpush2.bf16.msra.mxu0 0
        %624 = vmatprep.subr.bf16.mxu0 0
        %625 = vmatpush2.bf16.msra.mxu0 0
        %626 = vmatprep.subr.bf16.mxu0 0
        %627 = vmatpush2.bf16.msra.mxu0 0
        %628 = vmatprep.subr.bf16.mxu0 0
        %629 = vmatpush2.bf16.msra.mxu0 0
        %630 = vmatprep.subr.bf16.mxu0 0
        %631 = vmatpush2.bf16.msra.mxu0 0
        %632 = vmatprep.subr.bf16.mxu0 0
        %633 = vmatpush2.bf16.msra.mxu0 0
        %634 = vmatprep.subr.bf16.mxu0 0
        %635 = vmatpush2.bf16.msra.mxu0 0
        %636 = vmatprep.mubr.bf16.mxu0 0
        %637 = vmatmul.mubr.bf16.gmra.mxu0 %v602
        %v638 = vpop.f32.mrf.mxu0
        %v639 = vadd.f32 0.0, %v638
        %v640 = vpop.f32.mrf.mxu0
        %v641 = vpop.f32.mrf.mxu0
        %v642 = vadd.f32 0.0, %v641
        %v643 = vpop.f32.mrf.mxu0
        %644 = vdwg.mxu0
        %v645 = vpack.c.bf16 %v642, %v639
        %v647 = vunpack.c.l.b16 %v645
        %v648 = vunpack.c.h.b16 %v645
        %v649 = vpack.c.b16 %v647, %v647
        %v650 = vpack.c.b16 %v648, %v648
        %vm653 = vcmask 519168
        %654 = vst.msk [vmem:[#allocation3] sm:$0xf] %vm653, %v649
        %655 = vst.msk [vmem:[#allocation3 + $0x4] sm:$0xf] %vm653, %v650
        %v656 = vld [vmem:[%s428] sm:$0xff]
        %v657 = vld [vmem:[%s428 + $0x8] sm:$0xff]
        %v658 = vld [vmem:[%s495] sm:$0x1]
        %v660 = vlaneseq
        %v661 = vshrl.u32 %v660, 7
        %v662 = vsub.s32 0, %v661
        %v663 = vrot.slane %v658, %v662
        %v665 = vadd.f32 %v656, %v663
        %v666 = vadd.f32 %v657, %v663
        %vm667 = vcmp.gt.f32.partialorder %v665, 0.0
        %vm668 = vcmp.gt.f32.partialorder %v666, 0.0
        %v669 = vld [vmem:[#allocation2] sm:$0xf]
        %v670 = vld [vmem:[#allocation2 + $0x4] sm:$0xf]
        %v671 = vld [vmem:[#allocation3] sm:$0xf]
        %v672 = vld [vmem:[#allocation3 + $0x4] sm:$0xf]
        %v675 = vunpack.c.l.b16 %v669
        %v676 = vunpack.c.l.b16 %v670
        %v677 = vpack.c.b16 %v676, %v675
        %v680 = vunpack.c.l.b16 %v671
        %v681 = vunpack.c.l.b16 %v672
        %v682 = vpack.c.b16 %v681, %v680
        %vm683 = vcmask 64512
        %v685 = vsel %vm683, %v677, 0
        %v688 = vsel %vm683, %v682, 0
        %690 = vmatprep.subr.bf16.mxu0 0
        %691 = vmatpush1.bf16.xpose.msra.mxu0 0
        %692 = vmatprep.subr.bf16.mxu0 0
        %693 = vmatpush1.bf16.xpose.msra.mxu0 0
        %694 = vmatprep.subr.bf16.mxu0 0
        %695 = vmatpush1.bf16.xpose.msra.mxu0 0
        %696 = vmatprep.subr.bf16.mxu0 0
        %697 = vmatpush1.bf16.xpose.msra.mxu0 0
        %698 = vmatprep.subr.bf16.mxu0 0
        %699 = vmatpush1.bf16.xpose.msra.mxu0 0
        %700 = vmatprep.subr.bf16.mxu0 0
        %701 = vmatpush1.bf16.xpose.msra.mxu0 0
        %702 = vmatprep.subr.bf16.mxu0 0
        %703 = vmatpush1.bf16.xpose.msra.mxu0 0
        %704 = vmatprep.subr.bf16.mxu0 0
        %705 = vmatpush1.bf16.xpose.msra.mxu0 %v688
        %706 = vmatprep.subr.bf16.mxu0 0
        %707 = vmatpush2.bf16.xpose.msra.mxu0 0
        %708 = vmatprep.subr.bf16.mxu0 0
        %709 = vmatpush2.bf16.xpose.msra.mxu0 0
        %710 = vmatprep.subr.bf16.mxu0 0
        %711 = vmatpush2.bf16.xpose.msra.mxu0 0
        %712 = vmatprep.subr.bf16.mxu0 0
        %713 = vmatpush2.bf16.xpose.msra.mxu0 0
        %714 = vmatprep.subr.bf16.mxu0 0
        %715 = vmatpush2.bf16.xpose.msra.mxu0 0
        %716 = vmatprep.subr.bf16.mxu0 0
        %717 = vmatpush2.bf16.xpose.msra.mxu0 0
        %718 = vmatprep.subr.bf16.mxu0 0
        %719 = vmatpush2.bf16.xpose.msra.mxu0 0
        %720 = vmatprep.subr.bf16.mxu0 0
        %721 = vmatpush2.bf16.xpose.msra.mxu0 0
        %722 = vmatprep.mubr.bf16.mxu0 0
        %723 = vmatmul.mubr.bf16.gmra.mxu0 %v685
        %v724 = vpop.f32.mrf.mxu0
        %v725 = vadd.f32 0.0, %v724
        %v726 = vpop.f32.mrf.mxu0
        %v727 = vpop.f32.mrf.mxu0
        %v728 = vadd.f32 0.0, %v727
        %v729 = vpop.f32.mrf.mxu0
        %730 = vdwg.mxu0
        %v731 = vmul.f32 %v725, 0.35355338
        %v732 = vmul.f32 %v728, 0.35355338
        %v733 = vsel %vm667, -1e+08, %v731
        %v734 = vsel %vm668, -1e+08, %v732
        %vm735 = vcmask 130048
        %v736 = vsel %vm735, %v733, -inf
        %737 = vmax.xlane.f32.xlu0 %v736
        %v738 = vpop.xlane.xlu0 %737
        %v739 = vsel %vm735, %v734, -inf
        %740 = vmax.xlane.f32.xlu0 %v739
        %v741 = vpop.xlane.xlu0 %740
        %v742 = vsub.f32 %v733, %v738
        %v743 = vsub.f32 %v734, %v741
        %v744 = vmul.f32 %v742, 1.442695
        %v745 = vpow.pop %v744
        %v746 = vmul.f32 %v743, 1.442695
        %v747 = vpow.pop %v746
        %v748 = vsel %vm735, %v745, 0.0
        %749 = vadd.xlane.f32.xlu0 %v748
        %v750 = vpop.xlane.xlu0 %749
        %v751 = vsel %vm735, %v747, 0.0
        %752 = vadd.xlane.f32.xlu0 %v751
        %v753 = vpop.xlane.xlu0 %752
        %v754 = vrcp.pop %v750
        %v755 = vmul.f32 1.0, %v754
        %v756 = vrcp.pop %v753
        %v757 = vmul.f32 1.0, %v756
        %v758 = vmul.f32 %v745, %v755
        %v759 = vmul.f32 %v747, %v757
        %760 = vst.msk [vmem:[%s490] sm:$0xff] %vm735, %v758
        %761 = vst.msk [vmem:[%s490 + $0x8] sm:$0xff] %vm735, %v759
        %v762 = vpack.c.bf16 %v759, %v758
        %763 = vrot.lane.b32.xlu0 %v682, 96
        %v764 = vpop.permute.xlu0 %763
        %v767 = vsel %vm735, %v762, 0
        %769 = vmatprep.subr.bf16.mxu0 0
        %770 = vmatpush1.bf16.msra.mxu0 0
        %771 = vmatprep.subr.bf16.mxu0 0
        %772 = vmatpush1.bf16.msra.mxu0 0
        %773 = vmatprep.subr.bf16.mxu0 0
        %774 = vmatpush1.bf16.msra.mxu0 0
        %775 = vmatprep.subr.bf16.mxu0 0
        %776 = vmatpush1.bf16.msra.mxu0 0
        %777 = vmatprep.subr.bf16.mxu0 0
        %778 = vmatpush1.bf16.msra.mxu0 0
        %779 = vmatprep.subr.bf16.mxu0 0
        %780 = vmatpush1.bf16.msra.mxu0 0
        %781 = vmatprep.subr.bf16.mxu0 0
        %782 = vmatpush1.bf16.msra.mxu0 0
        %783 = vmatprep.subr.bf16.mxu0 0
        %784 = vmatpush1.bf16.msra.mxu0 %v764
        %785 = vmatprep.subr.bf16.mxu0 0
        %786 = vmatpush2.bf16.msra.mxu0 0
        %787 = vmatprep.subr.bf16.mxu0 0
        %788 = vmatpush2.bf16.msra.mxu0 0
        %789 = vmatprep.subr.bf16.mxu0 0
        %790 = vmatpush2.bf16.msra.mxu0 0
        %791 = vmatprep.subr.bf16.mxu0 0
        %792 = vmatpush2.bf16.msra.mxu0 0
        %793 = vmatprep.subr.bf16.mxu0 0
        %794 = vmatpush2.bf16.msra.mxu0 0
        %795 = vmatprep.subr.bf16.mxu0 0
        %796 = vmatpush2.bf16.msra.mxu0 0
        %797 = vmatprep.subr.bf16.mxu0 0
        %798 = vmatpush2.bf16.msra.mxu0 0
        %799 = vmatprep.subr.bf16.mxu0 0
        %800 = vmatpush2.bf16.msra.mxu0 0
        %801 = vmatprep.mubr.bf16.mxu0 0
        %802 = vmatmul.mubr.bf16.gmra.mxu0 %v767
        %v803 = vpop.f32.mrf.mxu0
        %v804 = vadd.f32 0.0, %v803
        %v805 = vpop.f32.mrf.mxu0
        %v806 = vpop.f32.mrf.mxu0
        %v807 = vadd.f32 0.0, %v806
        %v808 = vpop.f32.mrf.mxu0
        %809 = vdwg.mxu0
        %v810 = vpack.c.bf16 %v807, %v804
        %v812 = vunpack.c.l.b16 %v810
        %v813 = vunpack.c.h.b16 %v810
        %v814 = vpack.c.b16 %v812, %v812
        %v815 = vpack.c.b16 %v813, %v813
        %vm818 = vcmask 60416
        %819 = vst.msk [vmem:[#allocation4] sm:$0xf] %vm818, %v814
        %820 = vst.msk [vmem:[#allocation4 + $0x4] sm:$0xf] %vm818, %v815
        %v821 = vld [vmem:[#allocation2] sm:$0xf]
        %v822 = vld [vmem:[#allocation2 + $0x4] sm:$0xf]
        %v823 = vld [vmem:[#allocation3] sm:$0xf]
        %v824 = vld [vmem:[#allocation3 + $0x4] sm:$0xf]
        %v827 = vunpack.c.l.b16 %v821
        %v828 = vunpack.c.l.b16 %v822
        %v829 = vpack.c.b16 %v828, %v827
        %830 = vrot.lane.b32.xlu0 %v829, 120
        %v831 = vpop.permute.xlu0 %830
        %v834 = vunpack.c.l.b16 %v823
        %v835 = vunpack.c.l.b16 %v824
        %v836 = vpack.c.b16 %v835, %v834
        %837 = vrot.lane.b32.xlu0 %v836, 120
        %v838 = vpop.permute.xlu0 %837
        %v840 = vsel %vm683, %v831, 0
        %v843 = vsel %vm683, %v838, 0
        %845 = vmatprep.subr.bf16.mxu0 0
        %846 = vmatpush1.bf16.xpose.msra.mxu0 0
        %847 = vmatprep.subr.bf16.mxu0 0
        %848 = vmatpush1.bf16.xpose.msra.mxu0 0
        %849 = vmatprep.subr.bf16.mxu0 0
        %850 = vmatpush1.bf16.xpose.msra.mxu0 0
        %851 = vmatprep.subr.bf16.mxu0 0
        %852 = vmatpush1.bf16.xpose.msra.mxu0 0
        %853 = vmatprep.subr.bf16.mxu0 0
        %854 = vmatpush1.bf16.xpose.msra.mxu0 0
        %855 = vmatprep.subr.bf16.mxu0 0
        %856 = vmatpush1.bf16.xpose.msra.mxu0 0
        %857 = vmatprep.subr.bf16.mxu0 0
        %858 = vmatpush1.bf16.xpose.msra.mxu0 0
        %859 = vmatprep.subr.bf16.mxu0 0
        %860 = vmatpush1.bf16.xpose.msra.mxu0 %v843
        %861 = vmatprep.subr.bf16.mxu0 0
        %862 = vmatpush2.bf16.xpose.msra.mxu0 0
        %863 = vmatprep.subr.bf16.mxu0 0
        %864 = vmatpush2.bf16.xpose.msra.mxu0 0
        %865 = vmatprep.subr.bf16.mxu0 0
        %866 = vmatpush2.bf16.xpose.msra.mxu0 0
        %867 = vmatprep.subr.bf16.mxu0 0
        %868 = vmatpush2.bf16.xpose.msra.mxu0 0
        %869 = vmatprep.subr.bf16.mxu0 0
        %870 = vmatpush2.bf16.xpose.msra.mxu0 0
        %871 = vmatprep.subr.bf16.mxu0 0
        %872 = vmatpush2.bf16.xpose.msra.mxu0 0
        %873 = vmatprep.subr.bf16.mxu0 0
        %874 = vmatpush2.bf16.xpose.msra.mxu0 0
        %875 = vmatprep.subr.bf16.mxu0 0
        %876 = vmatpush2.bf16.xpose.msra.mxu0 0
        %877 = vmatprep.mubr.bf16.mxu0 0
        %878 = vmatmul.mubr.bf16.gmra.mxu0 %v840
        %v879 = vpop.f32.mrf.mxu0
        %v880 = vadd.f32 0.0, %v879
        %v881 = vpop.f32.mrf.mxu0
        %v882 = vpop.f32.mrf.mxu0
        %v883 = vadd.f32 0.0, %v882
        %v884 = vpop.f32.mrf.mxu0
        %885 = vdwg.mxu0
        %v886 = vmul.f32 %v880, 0.35355338
        %v887 = vmul.f32 %v883, 0.35355338
        %v888 = vsel %vm667, -1e+08, %v886
        %v889 = vsel %vm668, -1e+08, %v887
        %v890 = vsel %vm735, %v888, -inf
        %891 = vmax.xlane.f32.xlu0 %v890
        %v892 = vpop.xlane.xlu0 %891
        %v893 = vsel %vm735, %v889, -inf
        %894 = vmax.xlane.f32.xlu0 %v893
        %v895 = vpop.xlane.xlu0 %894
        %v896 = vsub.f32 %v888, %v892
        %v897 = vsub.f32 %v889, %v895
        %v898 = vmul.f32 %v896, 1.442695
        %v899 = vpow.pop %v898
        %v900 = vmul.f32 %v897, 1.442695
        %v901 = vpow.pop %v900
        %v902 = vsel %vm735, %v899, 0.0
        %903 = vadd.xlane.f32.xlu0 %v902
        %v904 = vpop.xlane.xlu0 %903
        %v905 = vsel %vm735, %v901, 0.0
        %906 = vadd.xlane.f32.xlu0 %v905
        %v907 = vpop.xlane.xlu0 %906
        %v908 = vrcp.pop %v904
        %v909 = vmul.f32 1.0, %v908
        %v910 = vrcp.pop %v907
        %v911 = vmul.f32 1.0, %v910
        %v912 = vmul.f32 %v899, %v909
        %v913 = vmul.f32 %v901, %v911
        %s914 = scalar_lea.vmem %s490, 16 [#allocation17]
        %915 = vst.msk [vmem:[%s914] sm:$0xff] %vm735, %v912
        %916 = vst.msk [vmem:[%s914 + $0x8] sm:$0xff] %vm735, %v913
        %v917 = vpack.c.bf16 %v913, %v912
        %918 = vrot.lane.b32.xlu0 %v836, 88
        %v919 = vpop.permute.xlu0 %918
        %v922 = vsel %vm735, %v917, 0
        %924 = vmatprep.subr.bf16.mxu0 0
        %925 = vmatpush1.bf16.msra.mxu0 0
        %926 = vmatprep.subr.bf16.mxu0 0
        %927 = vmatpush1.bf16.msra.mxu0 0
        %928 = vmatprep.subr.bf16.mxu0 0
        %929 = vmatpush1.bf16.msra.mxu0 0
        %930 = vmatprep.subr.bf16.mxu0 0
        %931 = vmatpush1.bf16.msra.mxu0 0
        %932 = vmatprep.subr.bf16.mxu0 0
        %933 = vmatpush1.bf16.msra.mxu0 0
        %934 = vmatprep.subr.bf16.mxu0 0
        %935 = vmatpush1.bf16.msra.mxu0 0
        %936 = vmatprep.subr.bf16.mxu0 0
        %937 = vmatpush1.bf16.msra.mxu0 0
        %938 = vmatprep.subr.bf16.mxu0 0
        %939 = vmatpush1.bf16.msra.mxu0 %v919
        %940 = vmatprep.subr.bf16.mxu0 0
        %941 = vmatpush2.bf16.msra.mxu0 0
        %942 = vmatprep.subr.bf16.mxu0 0
        %943 = vmatpush2.bf16.msra.mxu0 0
        %944 = vmatprep.subr.bf16.mxu0 0
        %945 = vmatpush2.bf16.msra.mxu0 0
        %946 = vmatprep.subr.bf16.mxu0 0
        %947 = vmatpush2.bf16.msra.mxu0 0
        %948 = vmatprep.subr.bf16.mxu0 0
        %949 = vmatpush2.bf16.msra.mxu0 0
        %950 = vmatprep.subr.bf16.mxu0 0
        %951 = vmatpush2.bf16.msra.mxu0 0
        %952 = vmatprep.subr.bf16.mxu0 0
        %953 = vmatpush2.bf16.msra.mxu0 0
        %954 = vmatprep.subr.bf16.mxu0 0
        %955 = vmatpush2.bf16.msra.mxu0 0
        %956 = vmatprep.mubr.bf16.mxu0 0
        %957 = vmatmul.mubr.bf16.gmra.mxu0 %v922
        %v958 = vpop.f32.mrf.mxu0
        %v959 = vadd.f32 0.0, %v958
        %v960 = vpop.f32.mrf.mxu0
        %v961 = vpop.f32.mrf.mxu0
        %v962 = vadd.f32 0.0, %v961
        %v963 = vpop.f32.mrf.mxu0
        %964 = vdwg.mxu0
        %v965 = vpack.c.bf16 %v962, %v959
        %v967 = vunpack.c.l.b16 %v965
        %v968 = vunpack.c.h.b16 %v965
        %v969 = vpack.c.b16 %v967, %v967
        %v970 = vpack.c.b16 %v968, %v968
        %971 = vrot.lane.b32.xlu0 %v969, 8
        %v972 = vpop.permute.xlu0 %971
        %973 = vrot.lane.b32.xlu0 %v970, 8
        %v974 = vpop.permute.xlu0 %973
        %vm977 = vcmask 126016
        %978 = vst.msk [vmem:[#allocation4] sm:$0xf] %vm977, %v972
        %979 = vst.msk [vmem:[#allocation4 + $0x4] sm:$0xf] %vm977, %v974
        %v980 = vld [vmem:[#allocation2] sm:$0xf]
        %v981 = vld [vmem:[#allocation2 + $0x4] sm:$0xf]
        %v982 = vld [vmem:[#allocation3] sm:$0xf]
        %v983 = vld [vmem:[#allocation3 + $0x4] sm:$0xf]
        %v986 = vunpack.c.l.b16 %v980
        %v987 = vunpack.c.l.b16 %v981
        %v988 = vpack.c.b16 %v987, %v986
        %989 = vrot.lane.b32.xlu0 %v988, 112
        %v990 = vpop.permute.xlu0 %989
        %v993 = vunpack.c.l.b16 %v982
        %v994 = vunpack.c.l.b16 %v983
        %v995 = vpack.c.b16 %v994, %v993
        %996 = vrot.lane.b32.xlu0 %v995, 112
        %v997 = vpop.permute.xlu0 %996
        %v999 = vsel %vm683, %v990, 0
        %v1002 = vsel %vm683, %v997, 0
        %1004 = vmatprep.subr.bf16.mxu0 0
        %1005 = vmatpush1.bf16.xpose.msra.mxu0 0
        %1006 = vmatprep.subr.bf16.mxu0 0
        %1007 = vmatpush1.bf16.xpose.msra.mxu0 0
        %1008 = vmatprep.subr.bf16.mxu0 0
        %1009 = vmatpush1.bf16.xpose.msra.mxu0 0
        %1010 = vmatprep.subr.bf16.mxu0 0
        %1011 = vmatpush1.bf16.xpose.msra.mxu0 0
        %1012 = vmatprep.subr.bf16.mxu0 0
        %1013 = vmatpush1.bf16.xpose.msra.mxu0 0
        %1014 = vmatprep.subr.bf16.mxu0 0
        %1015 = vmatpush1.bf16.xpose.msra.mxu0 0
        %1016 = vmatprep.subr.bf16.mxu0 0
        %1017 = vmatpush1.bf16.xpose.msra.mxu0 0
        %1018 = vmatprep.subr.bf16.mxu0 0
        %1019 = vmatpush1.bf16.xpose.msra.mxu0 %v1002
        %1020 = vmatprep.subr.bf16.mxu0 0
        %1021 = vmatpush2.bf16.xpose.msra.mxu0 0
        %1022 = vmatprep.subr.bf16.mxu0 0
        %1023 = vmatpush2.bf16.xpose.msra.mxu0 0
        %1024 = vmatprep.subr.bf16.mxu0 0
        %1025 = vmatpush2.bf16.xpose.msra.mxu0 0
        %1026 = vmatprep.subr.bf16.mxu0 0
        %1027 = vmatpush2.bf16.xpose.msra.mxu0 0
        %1028 = vmatprep.subr.bf16.mxu0 0
        %1029 = vmatpush2.bf16.xpose.msra.mxu0 0
        %1030 = vmatprep.subr.bf16.mxu0 0
        %1031 = vmatpush2.bf16.xpose.msra.mxu0 0
        %1032 = vmatprep.subr.bf16.mxu0 0
        %1033 = vmatpush2.bf16.xpose.msra.mxu0 0
        %1034 = vmatprep.subr.bf16.mxu0 0
        %1035 = vmatpush2.bf16.xpose.msra.mxu0 0
        %1036 = vmatprep.mubr.bf16.mxu0 0
        %1037 = vmatmul.mubr.bf16.gmra.mxu0 %v999
        %v1038 = vpop.f32.mrf.mxu0
        %v1039 = vadd.f32 0.0, %v1038
        %v1040 = vpop.f32.mrf.mxu0
        %v1041 = vpop.f32.mrf.mxu0
        %v1042 = vadd.f32 0.0, %v1041
        %v1043 = vpop.f32.mrf.mxu0
        %1044 = vdwg.mxu0
        %v1045 = vmul.f32 %v1039, 0.35355338
        %v1046 = vmul.f32 %v1042, 0.35355338
        %v1047 = vsel %vm667, -1e+08, %v1045
        %v1048 = vsel %vm668, -1e+08, %v1046
        %v1049 = vsel %vm735, %v1047, -inf
        %1050 = vmax.xlane.f32.xlu0 %v1049
        %v1051 = vpop.xlane.xlu0 %1050
        %v1052 = vsel %vm735, %v1048, -inf
        %1053 = vmax.xlane.f32.xlu0 %v1052
        %v1054 = vpop.xlane.xlu0 %1053
        %v1055 = vsub.f32 %v1047, %v1051
        %v1056 = vsub.f32 %v1048, %v1054
        %v1057 = vmul.f32 %v1055, 1.442695
        %v1058 = vpow.pop %v1057
        %v1059 = vmul.f32 %v1056, 1.442695
        %v1060 = vpow.pop %v1059
        %v1061 = vsel %vm735, %v1058, 0.0
        %1062 = vadd.xlane.f32.xlu0 %v1061
        %v1063 = vpop.xlane.xlu0 %1062
        %v1064 = vsel %vm735, %v1060, 0.0
        %1065 = vadd.xlane.f32.xlu0 %v1064
        %v1066 = vpop.xlane.xlu0 %1065
        %v1067 = vrcp.pop %v1063
        %v1068 = vmul.f32 1.0, %v1067
        %v1069 = vrcp.pop %v1066
        %v1070 = vmul.f32 1.0, %v1069
        %v1071 = vmul.f32 %v1058, %v1068
        %v1072 = vmul.f32 %v1060, %v1070
        %s1073 = scalar_lea.vmem %s490, 32 [#allocation17]
        %1074 = vst.msk [vmem:[%s1073] sm:$0xff] %vm735, %v1071
        %1075 = vst.msk [vmem:[%s1073 + $0x8] sm:$0xff] %vm735, %v1072
        %v1076 = vpack.c.bf16 %v1072, %v1071
        %1077 = vrot.lane.b32.xlu0 %v995, 80
        %v1078 = vpop.permute.xlu0 %1077
        %v1081 = vsel %vm735, %v1076, 0
        %1083 = vmatprep.subr.bf16.mxu0 0
        %1084 = vmatpush1.bf16.msra.mxu0 0
        %1085 = vmatprep.subr.bf16.mxu0 0
        %1086 = vmatpush1.bf16.msra.mxu0 0
        %1087 = vmatprep.subr.bf16.mxu0 0
        %1088 = vmatpush1.bf16.msra.mxu0 0
        %1089 = vmatprep.subr.bf16.mxu0 0
        %1090 = vmatpush1.bf16.msra.mxu0 0
        %1091 = vmatprep.subr.bf16.mxu0 0
        %1092 = vmatpush1.bf16.msra.mxu0 0
        %1093 = vmatprep.subr.bf16.mxu0 0
        %1094 = vmatpush1.bf16.msra.mxu0 0
        %1095 = vmatprep.subr.bf16.mxu0 0
        %1096 = vmatpush1.bf16.msra.mxu0 0
        %1097 = vmatprep.subr.bf16.mxu0 0
        %1098 = vmatpush1.bf16.msra.mxu0 %v1078
        %1099 = vmatprep.subr.bf16.mxu0 0
        %1100 = vmatpush2.bf16.msra.mxu0 0
        %1101 = vmatprep.subr.bf16.mxu0 0
        %1102 = vmatpush2.bf16.msra.mxu0 0
        %1103 = vmatprep.subr.bf16.mxu0 0
        %1104 = vmatpush2.bf16.msra.mxu0 0
        %1105 = vmatprep.subr.bf16.mxu0 0
        %1106 = vmatpush2.bf16.msra.mxu0 0
        %1107 = vmatprep.subr.bf16.mxu0 0
        %1108 = vmatpush2.bf16.msra.mxu0 0
        %1109 = vmatprep.subr.bf16.mxu0 0
        %1110 = vmatpush2.bf16.msra.mxu0 0
        %1111 = vmatprep.subr.bf16.mxu0 0
        %1112 = vmatpush2.bf16.msra.mxu0 0
        %1113 = vmatprep.subr.bf16.mxu0 0
        %1114 = vmatpush2.bf16.msra.mxu0 0
        %1115 = vmatprep.mubr.bf16.mxu0 0
        %1116 = vmatmul.mubr.bf16.gmra.mxu0 %v1081
        %v1117 = vpop.f32.mrf.mxu0
        %v1118 = vadd.f32 0.0, %v1117
        %v1119 = vpop.f32.mrf.mxu0
        %v1120 = vpop.f32.mrf.mxu0
        %v1121 = vadd.f32 0.0, %v1120
        %v1122 = vpop.f32.mrf.mxu0
        %1123 = vdwg.mxu0
        %v1124 = vpack.c.bf16 %v1121, %v1118
        %v1126 = vunpack.c.l.b16 %v1124
        %v1127 = vunpack.c.h.b16 %v1124
        %v1128 = vpack.c.b16 %v1126, %v1126
        %v1129 = vpack.c.b16 %v1127, %v1127
        %1130 = vrot.lane.b32.xlu0 %v1128, 16
        %v1131 = vpop.permute.xlu0 %1130
        %1132 = vrot.lane.b32.xlu0 %v1129, 16
        %v1133 = vpop.permute.xlu0 %1132
        %vm1136 = vcmask 191616
        %1137 = vst.msk [vmem:[#allocation4] sm:$0xf] %vm1136, %v1131
        %1138 = vst.msk [vmem:[#allocation4 + $0x4] sm:$0xf] %vm1136, %v1133
        %v1139 = vld [vmem:[#allocation2] sm:$0xf]
        %v1140 = vld [vmem:[#allocation2 + $0x4] sm:$0xf]
        %v1141 = vld [vmem:[#allocation3] sm:$0xf]
        %v1142 = vld [vmem:[#allocation3 + $0x4] sm:$0xf]
        %v1145 = vunpack.c.l.b16 %v1139
        %v1146 = vunpack.c.l.b16 %v1140
        %v1147 = vpack.c.b16 %v1146, %v1145
        %1148 = vrot.lane.b32.xlu0 %v1147, 104
        %v1149 = vpop.permute.xlu0 %1148
        %v1152 = vunpack.c.l.b16 %v1141
        %v1153 = vunpack.c.l.b16 %v1142
        %v1154 = vpack.c.b16 %v1153, %v1152
        %1155 = vrot.lane.b32.xlu0 %v1154, 104
        %v1156 = vpop.permute.xlu0 %1155
        %v1158 = vsel %vm683, %v1149, 0
        %v1161 = vsel %vm683, %v1156, 0
        %1163 = vmatprep.subr.bf16.mxu0 0
        %1164 = vmatpush1.bf16.xpose.msra.mxu0 0
        %1165 = vmatprep.subr.bf16.mxu0 0
        %1166 = vmatpush1.bf16.xpose.msra.mxu0 0
        %1167 = vmatprep.subr.bf16.mxu0 0
        %1168 = vmatpush1.bf16.xpose.msra.mxu0 0
        %1169 = vmatprep.subr.bf16.mxu0 0
        %1170 = vmatpush1.bf16.xpose.msra.mxu0 0
        %1171 = vmatprep.subr.bf16.mxu0 0
        %1172 = vmatpush1.bf16.xpose.msra.mxu0 0
        %1173 = vmatprep.subr.bf16.mxu0 0
        %1174 = vmatpush1.bf16.xpose.msra.mxu0 0
        %1175 = vmatprep.subr.bf16.mxu0 0
        %1176 = vmatpush1.bf16.xpose.msra.mxu0 0
        %1177 = vmatprep.subr.bf16.mxu0 0
        %1178 = vmatpush1.bf16.xpose.msra.mxu0 %v1161
        %1179 = vmatprep.subr.bf16.mxu0 0
        %1180 = vmatpush2.bf16.xpose.msra.mxu0 0
        %1181 = vmatprep.subr.bf16.mxu0 0
        %1182 = vmatpush2.bf16.xpose.msra.mxu0 0
        %1183 = vmatprep.subr.bf16.mxu0 0
        %1184 = vmatpush2.bf16.xpose.msra.mxu0 0
        %1185 = vmatprep.subr.bf16.mxu0 0
        %1186 = vmatpush2.bf16.xpose.msra.mxu0 0
        %1187 = vmatprep.subr.bf16.mxu0 0
        %1188 = vmatpush2.bf16.xpose.msra.mxu0 0
        %1189 = vmatprep.subr.bf16.mxu0 0
        %1190 = vmatpush2.bf16.xpose.msra.mxu0 0
        %1191 = vmatprep.subr.bf16.mxu0 0
        %1192 = vmatpush2.bf16.xpose.msra.mxu0 0
        %1193 = vmatprep.subr.bf16.mxu0 0
        %1194 = vmatpush2.bf16.xpose.msra.mxu0 0
        %1195 = vmatprep.mubr.bf16.mxu0 0
        %1196 = vmatmul.mubr.bf16.gmra.mxu0 %v1158
        %v1197 = vpop.f32.mrf.mxu0
        %v1198 = vadd.f32 0.0, %v1197
        %v1199 = vpop.f32.mrf.mxu0
        %v1200 = vpop.f32.mrf.mxu0
        %v1201 = vadd.f32 0.0, %v1200
        %v1202 = vpop.f32.mrf.mxu0
        %1203 = vdwg.mxu0
        %v1204 = vmul.f32 %v1198, 0.35355338
        %v1205 = vmul.f32 %v1201, 0.35355338
        %v1206 = vsel %vm667, -1e+08, %v1204
        %v1207 = vsel %vm668, -1e+08, %v1205
        %v1208 = vsel %vm735, %v1206, -inf
        %1209 = vmax.xlane.f32.xlu0 %v1208
        %v1210 = vpop.xlane.xlu0 %1209
        %v1211 = vsel %vm735, %v1207, -inf
        %1212 = vmax.xlane.f32.xlu0 %v1211
        %v1213 = vpop.xlane.xlu0 %1212
        %v1214 = vsub.f32 %v1206, %v1210
        %v1215 = vsub.f32 %v1207, %v1213
        %v1216 = vmul.f32 %v1214, 1.442695
        %v1217 = vpow.pop %v1216
        %v1218 = vmul.f32 %v1215, 1.442695
        %v1219 = vpow.pop %v1218
        %v1220 = vsel %vm735, %v1217, 0.0
        %1221 = vadd.xlane.f32.xlu0 %v1220
        %v1222 = vpop.xlane.xlu0 %1221
        %v1223 = vsel %vm735, %v1219, 0.0
        %1224 = vadd.xlane.f32.xlu0 %v1223
        %v1225 = vpop.xlane.xlu0 %1224
        %v1226 = vrcp.pop %v1222
        %v1227 = vmul.f32 1.0, %v1226
        %v1228 = vrcp.pop %v1225
        %v1229 = vmul.f32 1.0, %v1228
        %v1230 = vmul.f32 %v1217, %v1227
        %v1231 = vmul.f32 %v1219, %v1229
        %s1232 = scalar_lea.vmem %s490, 48 [#allocation17]
        %1233 = vst.msk [vmem:[%s1232] sm:$0xff] %vm735, %v1230
        %1234 = vst.msk [vmem:[%s1232 + $0x8] sm:$0xff] %vm735, %v1231
        %v1235 = vpack.c.bf16 %v1231, %v1230
        %1236 = vrot.lane.b32.xlu0 %v1154, 72
        %v1237 = vpop.permute.xlu0 %1236
        %v1240 = vsel %vm735, %v1235, 0
        %1242 = vmatprep.subr.bf16.mxu0 0
        %1243 = vmatpush1.bf16.msra.mxu0 0
        %1244 = vmatprep.subr.bf16.mxu0 0
        %1245 = vmatpush1.bf16.msra.mxu0 0
        %1246 = vmatprep.subr.bf16.mxu0 0
        %1247 = vmatpush1.bf16.msra.mxu0 0
        %1248 = vmatprep.subr.bf16.mxu0 0
        %1249 = vmatpush1.bf16.msra.mxu0 0
        %1250 = vmatprep.subr.bf16.mxu0 0
        %1251 = vmatpush1.bf16.msra.mxu0 0
        %1252 = vmatprep.subr.bf16.mxu0 0
        %1253 = vmatpush1.bf16.msra.mxu0 0
        %1254 = vmatprep.subr.bf16.mxu0 0
        %1255 = vmatpush1.bf16.msra.mxu0 0
        %1256 = vmatprep.subr.bf16.mxu0 0
        %1257 = vmatpush1.bf16.msra.mxu0 %v1237
        %1258 = vmatprep.subr.bf16.mxu0 0
        %1259 = vmatpush2.bf16.msra.mxu0 0
        %1260 = vmatprep.subr.bf16.mxu0 0
        %1261 = vmatpush2.bf16.msra.mxu0 0
        %1262 = vmatprep.subr.bf16.mxu0 0
        %1263 = vmatpush2.bf16.msra.mxu0 0
        %1264 = vmatprep.subr.bf16.mxu0 0
        %1265 = vmatpush2.bf16.msra.mxu0 0
        %1266 = vmatprep.subr.bf16.mxu0 0
        %1267 = vmatpush2.bf16.msra.mxu0 0
        %1268 = vmatprep.subr.bf16.mxu0 0
        %1269 = vmatpush2.bf16.msra.mxu0 0
        %1270 = vmatprep.subr.bf16.mxu0 0
        %1271 = vmatpush2.bf16.msra.mxu0 0
        %1272 = vmatprep.subr.bf16.mxu0 0
        %1273 = vmatpush2.bf16.msra.mxu0 0
        %1274 = vmatprep.mubr.bf16.mxu0 0
        %1275 = vmatmul.mubr.bf16.gmra.mxu0 %v1240
        %v1276 = vpop.f32.mrf.mxu0
        %v1277 = vadd.f32 0.0, %v1276
        %v1278 = vpop.f32.mrf.mxu0
        %v1279 = vpop.f32.mrf.mxu0
        %v1280 = vadd.f32 0.0, %v1279
        %v1281 = vpop.f32.mrf.mxu0
        %1282 = vdwg.mxu0
        %v1283 = vpack.c.bf16 %v1280, %v1277
        %v1285 = vunpack.c.l.b16 %v1283
        %v1286 = vunpack.c.h.b16 %v1283
        %v1287 = vpack.c.b16 %v1285, %v1285
        %v1288 = vpack.c.b16 %v1286, %v1286
        %1289 = vrot.lane.b32.xlu0 %v1287, 24
        %v1290 = vpop.permute.xlu0 %1289
        %1291 = vrot.lane.b32.xlu0 %v1288, 24
        %v1292 = vpop.permute.xlu0 %1291
        %vm1295 = vcmask 257216
        %1296 = vst.msk [vmem:[#allocation4] sm:$0xf] %vm1295, %v1290
        %1297 = vst.msk [vmem:[#allocation4 + $0x4] sm:$0xf] %vm1295, %v1292
        %v1298 = vld [vmem:[#allocation4] sm:$0xf]
        %v1299 = vld [vmem:[#allocation4 + $0x4] sm:$0xf]
        %v1300 = vld [vmem:[#allocation14] sm:$0xf]
        %v1301 = vld [vmem:[#allocation14 + $0x4] sm:$0xf]
        %v1302 = vld [vmem:[#allocation14 + $0x8] sm:$0xf]
        %v1303 = vld [vmem:[#allocation14 + $0xc] sm:$0xf]
        %v1306 = vunpack.c.l.b16 %v1298
        %v1307 = vunpack.c.l.b16 %v1299
        %v1308 = vpack.c.b16 %v1307, %v1306
        %v1313 = vunpack.c.l.b16 %v1300
        %v1314 = vunpack.c.l.b16 %v1301
        %v1315 = vunpack.c.l.b16 %v1302
        %v1316 = vunpack.c.l.b16 %v1303
        %v1317 = vpack.c.b16 %v1314, %v1313
        %v1318 = vpack.c.b16 %v1316, %v1315
        %v1322 = vsel %vm522, %v1308, 0
        %1324 = vmatprep.subr.bf16.mxu0 0
        %1325 = vmatpush1.bf16.msra.mxu0 0
        %1326 = vmatprep.subr.bf16.mxu0 0
        %1327 = vmatpush1.bf16.msra.mxu0 0
        %1328 = vmatprep.subr.bf16.mxu0 0
        %1329 = vmatpush1.bf16.msra.mxu0 0
        %1330 = vmatprep.subr.bf16.mxu0 0
        %1331 = vmatpush1.bf16.msra.mxu0 0
        %1332 = vmatprep.subr.bf16.mxu0 0
        %1333 = vmatpush1.bf16.msra.mxu0 0
        %1334 = vmatprep.subr.bf16.mxu0 0
        %1335 = vmatpush1.bf16.msra.mxu0 0
        %1336 = vmatprep.subr.bf16.mxu0 0
        %1337 = vmatpush1.bf16.msra.mxu0 %v1318
        %1338 = vmatprep.subr.bf16.mxu0 0
        %1339 = vmatpush1.bf16.msra.mxu0 %v1317
        %1340 = vmatprep.subr.bf16.mxu0 0
        %1341 = vmatpush2.bf16.msra.mxu0 0
        %1342 = vmatprep.subr.bf16.mxu0 0
        %1343 = vmatpush2.bf16.msra.mxu0 0
        %1344 = vmatprep.subr.bf16.mxu0 0
        %1345 = vmatpush2.bf16.msra.mxu0 0
        %1346 = vmatprep.subr.bf16.mxu0 0
        %1347 = vmatpush2.bf16.msra.mxu0 0
        %1348 = vmatprep.subr.bf16.mxu0 0
        %1349 = vmatpush2.bf16.msra.mxu0 0
        %1350 = vmatprep.subr.bf16.mxu0 0
        %1351 = vmatpush2.bf16.msra.mxu0 0
        %1352 = vmatprep.subr.bf16.mxu0 0
        %1353 = vmatpush2.bf16.msra.mxu0 0
        %1354 = vmatprep.subr.bf16.mxu0 0
        %1355 = vmatpush2.bf16.msra.mxu0 0
        %1356 = vmatprep.mubr.bf16.mxu0 0
        %1357 = vmatmul.mubr.bf16.gmra.mxu0 %v1322
        %v1358 = vpop.f32.mrf.mxu0
        %v1359 = vadd.f32 0.0, %v1358
        %v1360 = vpop.f32.mrf.mxu0
        %v1361 = vpop.f32.mrf.mxu0
        %v1362 = vadd.f32 0.0, %v1361
        %v1363 = vpop.f32.mrf.mxu0
        %1364 = vdwg.mxu0
        %1365 = vst.msk [vmem:[%s483] sm:$0xff] %vm522, %v1359
        %1366 = vst.msk [vmem:[%s483 + $0x8] sm:$0xff] %vm522, %v1362
        %s1367 = sand.u32 %s227, 1
        %s1368 = scalar_lea.sflag [#allocation7], %s1367
        %s1369 = sand.u32 %s227, 1
        %s1370 = smul.addr %s1369, 16
        %s1371 = scalar_lea.vmem [#allocation16], %s1370
        %s1372 = sand.u32 %s255, 1
        %s1373 = scalar_lea.sflag [#allocation18], %s1372
        %s1374 = sand.u32 %s255, 1
        %s1375 = smul.addr %s1374, 64
        %s1376 = scalar_lea.vmem [#allocation17], %s1375
        // Predicated region
        $region73: #{tpu_custom_call.1} parent=47 // pred_check
          %p1377 = pneg %p237
        $region74: #{tpu_custom_call.1} parent=47 // pred_check_branch
          %1379 = sbr.rel (%p1377) target = $region76
        $region75: #{tpu_custom_call.1} parent=47 // pred_region
          %s1380 = smul.u32 2, %s39
          %s1382 = ssub.s32 256, 256
          %1383 = vsyncadd %s1368, %s1382
          %s1384 = smul.addr %s38, 2
          %s1385 = sadd.s32 %s1380, %s1384
          %s1386 = smul.addr %s1385, 128
          %s1387 = scalar_lea.hbm %s7, %s1386
          %s1388 = sshll.u32 %s1371, 4
          %s1389 = int_to_ptr.vmem [resolvable:$true] %s1388
          %1394 = dma.vmem_to_hbm [thread:$0]  %s1389, 256, %s1387, %s1368, 128, 128, 8
        $region76: #{tpu_custom_call.1} parent=47 // pred_fallthru
          _
        // Predicated region
        $region77: #{tpu_custom_call.1} parent=47 // pred_check
          %p1395 = pneg %p265
        $region78: #{tpu_custom_call.1} parent=47 // pred_check_branch
          %1397 = sbr.rel (%p1395) target = $region80
        $region79: #{tpu_custom_call.1} parent=47 // pred_region
          #allocation20 [shape = 'u32[6]{0}', space=smem, size = 0x18, scoped, tag = 'DMA stride descriptor']
          %s1398 = smul.u32 2, %s39
          %s1400 = ssub.s32 1024, 1024
          %1401 = vsyncadd %s1373, %s1400
          %s1402 = smul.addr %s38, 2
          %s1403 = sadd.s32 %s1398, %s1402
          %s1404 = smul.addr %s1403, 128
          %s1405 = scalar_lea.hbm %s8, %s1404
          %s1407 = sshll.u32 1, 14
          %s1408 = sxor.u32 4294967295, %s1407
          %s1411 = sshll.u32 7, 18
          %s1412 = sxor.u32 4294967295, %s1411
          %s1413 = sand.u32 0, %s1412
          %s1415 = sor.u32 %s1413, 0
          %s1416 = sshll.u32 %s1376, 4
          %s1417 = int_to_ptr.vmem [resolvable:$true] %s1416
          %1423 = sst [smem:[#allocation20]] 256
          %s1424 = scalar_lea.smem [#allocation20], 1
          %1425 = sst [smem:[%s1424]] 512
          %s1426 = scalar_lea.smem [#allocation20], 2
          %1427 = sst [smem:[%s1426]] 2
          %s1428 = scalar_lea.smem [#allocation20], 3
          %1429 = sst [smem:[%s1428]] 128
          %s1430 = scalar_lea.smem [#allocation20], 4
          %1431 = sst [smem:[%s1430]] 128
          %s1432 = scalar_lea.smem [#allocation20], 5
          %1433 = sst [smem:[%s1432]] 8
          %1435 = dma.general %s1417, 1024, %s1405, %s1373, 131072, [#allocation20], %s1415, 0
        $region80: #{tpu_custom_call.1} parent=47 // pred_fallthru
          _
      $region48: #{tpu_custom_call.1} parent=5 // pred_fallthru
        _
      %p1436 = scmp.le.s32.totalorder 2, %s29
      // Predicated region
      $region81: #{tpu_custom_call.1} parent=5 // pred_check
        %p1437 = pneg %p1436
      $region82: #{tpu_custom_call.1} parent=5 // pred_check_branch
        %1439 = sbr.rel (%p1437) target = $region84
      $region83: #{tpu_custom_call.1} parent=5 // pred_region
        %s1440 = ssub.s32 %s29, 2
        // Predicated region
        $region85: #{tpu_custom_call.1} parent=83 // pred_check
          %p1441 = pneg %p243
        $region86: #{tpu_custom_call.1} parent=83 // pred_check_branch
          %1443 = sbr.rel (%p1441) target = $region88
        $region87: #{tpu_custom_call.1} parent=83 // pred_region
          %s1444 = sand.u32 %s228, 1
          %s1445 = scalar_lea.sflag [#allocation7], %s1444
          %s1446 = sand.u32 %s228, 1
          %s1447 = smul.addr %s1446, 16
          %s1448 = scalar_lea.vmem [#allocation16], %s1447
          %1449 = dma.done %s1445, 256
        $region88: #{tpu_custom_call.1} parent=83 // pred_fallthru
          _
        // Predicated region
        $region89: #{tpu_custom_call.1} parent=83 // pred_check
          %p1450 = pneg %p271
        $region90: #{tpu_custom_call.1} parent=83 // pred_check_branch
          %1452 = sbr.rel (%p1450) target = $region92
        $region91: #{tpu_custom_call.1} parent=83 // pred_region
          %s1453 = sand.u32 %s256, 1
          %s1454 = scalar_lea.sflag [#allocation18], %s1453
          %s1455 = sand.u32 %s256, 1
          %s1456 = smul.addr %s1455, 64
          %s1457 = scalar_lea.vmem [#allocation17], %s1456
          %1458 = dma.done %s1454, 1024
        $region92: #{tpu_custom_call.1} parent=83 // pred_fallthru
          _
      $region84: #{tpu_custom_call.1} parent=5 // pred_fallthru
        _
    $region6: #{tpu_custom_call.1} parent=1 // loop_footer
      %s33 = sadd.s32 1, %s29
    $region7: #{tpu_custom_call.1} parent=1 // loop_footer_branch
      %28 = sbr.rel target = $region3
    $region8: #{tpu_custom_call.1} parent=1 // loop_exit
      _
    %1459 = vsyncpa [#allocation6], 1
    %s1460 = scalar_lea.sflag [#allocation6], 1
    %1461 = vsyncpa %s1460, 1
    %1462 = vsyncpa [#allocation9], 1
    %s1463 = scalar_lea.sflag [#allocation9], 1
    %1464 = vsyncpa %s1463, 1
    %1465 = vsyncpa [#allocation12], 1
    %1466 = vsyncpa [#allocation15], 1
    %1467 = vsyncpa [#allocation7], 1
    %s1468 = scalar_lea.sflag [#allocation7], 1
    %1469 = vsyncpa %s1468, 1
    %1470 = vsyncpa [#allocation18], 1
    %s1471 = scalar_lea.sflag [#allocation18], 1
    %1472 = vsyncpa %s1471, 1

</llo_original>
